<compile_context>
chip_gen: v6e
topology: v6e:2x2x1
jax: 0.10.0
libtpu: 0.0.40
codegen_flags: <defaults>
</compile_context>

<pallas_src>
import functools

import jax
import jax.numpy as jnp
from jax.experimental import pallas as pl
from jax.experimental.pallas import tpu as pltpu

OUT_DIM = 6      # real number of output logits
OUT_PAD = 128    # lane-dense padded output width (unmasked stores)
_SUBLANE = 8
_LANE = 128


def _round_up(n, m):
    return ((n + m - 1) // m) * m


# ----------------------------- in-kernel helpers -----------------------------

def _gelu(x):
    # TODO(synk): PyTorch F.gelu / nn.GELU default to the exact erf form; the tanh
    # approximation is used for guaranteed Mosaic lowering (max abs diff ~1e-3).
    return jax.nn.gelu(x, approximate=True)


def _silu(x):
    return x * jax.nn.sigmoid(x)


def _layernorm(h, w, b, eps=1e-5):
    mu = jnp.mean(h, axis=-1, keepdims=True)
    var = jnp.mean(jnp.square(h - mu), axis=-1, keepdims=True)
    return (h - mu) * jax.lax.rsqrt(var + eps) * w + b


def _dot(a, b):
    return jnp.dot(a, b, preferred_element_type=jnp.float32)


# ------------------------------- fused kernel --------------------------------

def fused_forward_kernel(x_ref, w_ref, logits_ref, *, offsets, num_layers):
    """Entire forward pass in a single grid-less call.

    All weights live in ONE lane-padded [rows, slab_w] VMEM slab (`w_ref`).
    `offsets[name] = (row_offset, rows, cols)` are Python ints baked in at
    trace time; every tensor starts on an 8-sublane boundary, so the slices
    below are static tile-aligned views.
    """

    def view(name):
        off, r, c = offsets[name]
        return w_ref[off:off + r, 0:c]

    x = x_ref[...]                                               # [S, input_dim]

    # input_projection folded into quantum_embedding linear1 (host-side, exact),
    # then GELU and the second quantum_embedding linear.
    t = _gelu(_dot(x, view("w_f")) + view("b_f"))                # [S, 2D]
    h = _dot(t, view("qw2")) + view("qb2")                       # [S, D]

    # Encoder layers + quantum_circuit residual; static unrolled loop
    # (all weights VMEM-resident, statically indexed).
    for l in range(num_layers):
        # Degenerate length-1 self-attention: softmax over 1 key == 1, so
        # attn = out_proj(V) = h @ (Wv@Wo) + (bv@Wo + bo)   (pre-fused on host).
        attn = _dot(h, view(f"wvo_{l}")) + view(f"bvo_{l}")
        h1 = _layernorm(h + attn, view(f"ln1w_{l}"), view(f"ln1b_{l}"))

        ff = _gelu(_dot(h1, view(f"fw1_{l}")) + view(f"fb1_{l}"))
        ff = _dot(ff, view(f"fw2_{l}")) + view(f"fb2_{l}")
        h = _layernorm(h1 + ff, view(f"ln2w_{l}"), view(f"ln2b_{l}"))

        # quantum_circuit: Linear -> SiLU -> (Dropout = id, eval) -> Linear, + residual
        q = _silu(_dot(h, view(f"cw1_{l}")) + view(f"cb1_{l}"))
        h = _dot(q, view(f"cw2_{l}")) + view(f"cb2_{l}") + h

    # output_layer, lane-padded to OUT_PAD lanes -> single unmasked lane-dense store.
    logits_ref[...] = _dot(h, view("wout")) + view("bout")


# ------------------------------ pallas_call glue ------------------------------

def make_forward_fn(offsets, num_layers):
    kernel = functools.partial(fused_forward_kernel,
                               offsets=offsets, num_layers=num_layers)
    vmem = pl.BlockSpec(memory_space=pltpu.MemorySpace.VMEM)

    @jax.jit
    def forward(x, w_slab):
        seq = x.shape[0]
        logits_pad = pl.pallas_call(
            kernel,
            out_shape=jax.ShapeDtypeStruct((seq, OUT_PAD), jnp.float32),
            in_specs=[vmem, vmem],
            out_specs=vmem,
        )(x, w_slab)

        outputs = logits_pad[:, :OUT_DIM]          # mirrors `outputs` in PyTorch
        row0 = outputs[0]
        metrics = {
            "wear_level": jax.nn.sigmoid(row0[0]),
            "remaining_life": jnp.maximum(row0[1], 0.0),
            "failure_probability": jax.nn.sigmoid(row0[2]),
            "quality_impact": jax.nn.sigmoid(row0[3]),
            "confidence_score": jax.nn.sigmoid(row0[4]),
            "anomaly_score": jax.nn.sigmoid(row0[5]),
        }
        return metrics, outputs

    return forward


# ------------------------------ parameter setup -------------------------------

class _WeightPacker:
    """Packs 2-D tensors into one lane-padded [rows, slab_w] slab, each tensor
    starting on an 8-sublane boundary.  Offsets are Python ints (trace-time)."""

    def __init__(self, slab_w):
        self.slab_w = slab_w
        self._parts = []
        self.offsets = {}
        self._row = 0

    def add(self, name, arr):
        arr = jnp.asarray(arr, jnp.float32)
        r, c = arr.shape
        assert c <= self.slab_w, f"{name}: {c} > slab width {self.slab_w}"
        rp = _round_up(r, _SUBLANE)
        padded = jnp.zeros((rp, self.slab_w), jnp.float32).at[:r, :c].set(arr)
        self._parts.append(padded)
        self.offsets[name] = (self._row, r, c)
        self._row += rp

    def pack(self):
        return jnp.concatenate(self._parts, axis=0)


def _linear(key, fan_in, fan_out):
    kw, kb = jax.random.split(key)
    bound = 1.0 / (fan_in ** 0.5)
    w = jax.random.uniform(kw, (fan_in, fan_out), jnp.float32, -bound, bound)
    b = jax.random.uniform(kb, (1, fan_out), jnp.float32, -bound, bound)
    return w, b


def init_packed_params(key, input_dim, hidden_dim, num_layers):
    """Builds the single packed weight slab + static offset table.

    Kernel layout: weights [in, out], biases [1, out] (x @ W + b).  Porting real
    PyTorch nn.Linear weights ([out, in]) requires transposition, and W_vo must
    then be built as Wv^T @ Wo^T in this layout.
    """
    slab_w = _round_up(max(4 * hidden_dim, 2 * hidden_dim, OUT_PAD), _LANE)
    packer = _WeightPacker(slab_w)
    keys = jax.random.split(key, 4 + num_layers)

    wi, bi = _linear(keys[0], input_dim, hidden_dim)             # input_projection
    qw1, qb1 = _linear(keys[1], hidden_dim, 2 * hidden_dim)      # quantum_embedding L1
    qw2, qb2 = _linear(keys[2], 2 * hidden_dim, hidden_dim)      # quantum_embedding L2
    # Fold input_projection into quantum_embedding's first linear (exact).
    packer.add("w_f", wi @ qw1)
    packer.add("b_f", bi @ qw1 + qb1)
    packer.add("qw2", qw2)
    packer.add("qb2", qb2)

    ones = jnp.ones((1, hidden_dim), jnp.float32)
    zeros = jnp.zeros((1, hidden_dim), jnp.float32)
    for l in range(num_layers):
        lk = jax.random.split(keys[3 + l], 6)
        wv, bv = _linear(lk[0], hidden_dim, hidden_dim)          # V slice of attn in_proj
        wo_, bo_ = _linear(lk[1], hidden_dim, hidden_dim)        # attn out_proj
        # Length-1 attention has no nonlinearity between V and out_proj -> pre-fuse.
        packer.add(f"wvo_{l}", wv @ wo_)
        packer.add(f"bvo_{l}", bv @ wo_ + bo_)
        packer.add(f"ln1w_{l}", ones)
        packer.add(f"ln1b_{l}", zeros)
        fw1, fb1 = _linear(lk[2], hidden_dim, 4 * hidden_dim)    # encoder FFN linear1
        fw2, fb2 = _linear(lk[3], 4 * hidden_dim, hidden_dim)    # encoder FFN linear2
        packer.add(f"fw1_{l}", fw1)
        packer.add(f"fb1_{l}", fb1)
        packer.add(f"fw2_{l}", fw2)
        packer.add(f"fb2_{l}", fb2)
        packer.add(f"ln2w_{l}", ones)
        packer.add(f"ln2b_{l}", zeros)
        cw1, cb1 = _linear(lk[4], hidden_dim, 2 * hidden_dim)    # quantum_circuit L1
        cw2, cb2 = _linear(lk[5], 2 * hidden_dim, hidden_dim)    # quantum_circuit L2
        packer.add(f"cw1_{l}", cw1)
        packer.add(f"cb1_{l}", cb1)
        packer.add(f"cw2_{l}", cw2)
        packer.add(f"cb2_{l}", cb2)

    wout, bout = _linear(keys[3 + num_layers], hidden_dim, OUT_DIM)  # output_layer
    wout_pad = jnp.zeros((hidden_dim, OUT_PAD), jnp.float32).at[:, :OUT_DIM].set(wout)
    bout_pad = jnp.zeros((1, OUT_PAD), jnp.float32).at[:, :OUT_DIM].set(bout)
    packer.add("wout", wout_pad)
    packer.add("bout", bout_pad)

    return packer.pack(), packer.offsets


# ----------------------------------- main --------------------------------------

if __name__ == "__main__":
    INPUT_DIM, HIDDEN_DIM, NUM_LAYERS, SEQ = 16, 32, 2, 8

    key = jax.random.PRNGKey(0)
    kx, kp = jax.random.split(key)
    x = jax.random.normal(kx, (SEQ, INPUT_DIM), jnp.float32)
    w_slab, offsets = init_packed_params(kp, INPUT_DIM, HIDDEN_DIM, NUM_LAYERS)

    forward = make_forward_fn(offsets, NUM_LAYERS)
    metrics, outputs = forward(x, w_slab)
    jax.block_until_ready((metrics, outputs))
    print("KERNEL_OK")
</pallas_src>

<mosaic_0001>
module attributes {stable_mosaic.version = 11 : i64} {
  func.func @fused_forward_kernel(%arg0: memref<8x16xf32, #tpu.memory_space<vmem>>, %arg1: memref<856x128xf32, #tpu.memory_space<vmem>>, %arg2: memref<8x128xf32, #tpu.memory_space<vmem>>) attributes {dimension_semantics = [], scalar_prefetch = 0 : i64, scratch_operands = 0 : i64, tpu.core_type = #tpu.core_type<tc>} {
    %c0 = arith.constant 0 : index
    %c0_0 = arith.constant 0 : index
    %0 = vector.load %arg0[%c0, %c0_0] : memref<8x16xf32, #tpu.memory_space<vmem>>, vector<8x16xf32>
    %c0_1 = arith.constant 0 : index
    %c0_2 = arith.constant 0 : index
    %1 = vector.load %arg1[%c0_1, %c0_2] : memref<856x128xf32, #tpu.memory_space<vmem>>, vector<16x64xf32>
    %cst = arith.constant dense<0.000000e+00> : vector<8x64xf32>
    %2 = tpu.matmul %0, %1, %cst {dimension_numbers = #tpu.dot_dimension_numbers<[1], [0], [0], [1], [0, 0, 1, 1], [], []>} : vector<8x16xf32>, vector<16x64xf32>, vector<8x64xf32> -> vector<8x64xf32>
    %c16 = arith.constant 16 : index
    %c0_3 = arith.constant 0 : index
    %3 = vector.load %arg1[%c16, %c0_3] : memref<856x128xf32, #tpu.memory_space<vmem>>, vector<1x64xf32>
    %4 = vector.broadcast %3 : vector<1x64xf32> to vector<8x64xf32>
    %5 = arith.addf %2, %4 : vector<8x64xf32>
    %6 = arith.mulf %5, %5 : vector<8x64xf32>
    %7 = arith.mulf %5, %6 : vector<8x64xf32>
    %cst_4 = arith.constant 4.471500e-02 : f32
    %8 = vector.broadcast %cst_4 : f32 to vector<8x64xf32>
    %9 = arith.mulf %8, %7 : vector<8x64xf32>
    %10 = arith.addf %5, %9 : vector<8x64xf32>
    %cst_5 = arith.constant 0.797884583 : f32
    %11 = vector.broadcast %cst_5 : f32 to vector<8x64xf32>
    %12 = arith.mulf %11, %10 : vector<8x64xf32>
    %13 = math.tanh %12 : vector<8x64xf32>
    %cst_6 = arith.constant 1.000000e+00 : f32
    %14 = vector.broadcast %cst_6 : f32 to vector<8x64xf32>
    %15 = arith.addf %14, %13 : vector<8x64xf32>
    %cst_7 = arith.constant 5.000000e-01 : f32
    %16 = vector.broadcast %cst_7 : f32 to vector<8x64xf32>
    %17 = arith.mulf %16, %15 : vector<8x64xf32>
    %18 = arith.mulf %5, %17 : vector<8x64xf32>
    %c24 = arith.constant 24 : index
    %c0_8 = arith.constant 0 : index
    %19 = vector.load %arg1[%c24, %c0_8] : memref<856x128xf32, #tpu.memory_space<vmem>>, vector<64x32xf32>
    %cst_9 = arith.constant dense<0.000000e+00> : vector<8x32xf32>
    %20 = tpu.matmul %18, %19, %cst_9 {dimension_numbers = #tpu.dot_dimension_numbers<[1], [0], [0], [1], [0, 0, 1, 1], [], []>} : vector<8x64xf32>, vector<64x32xf32>, vector<8x32xf32> -> vector<8x32xf32>
    %c88 = arith.constant 88 : index
    %c0_10 = arith.constant 0 : index
    %21 = vector.load %arg1[%c88, %c0_10] : memref<856x128xf32, #tpu.memory_space<vmem>>, vector<1x32xf32>
    %22 = vector.broadcast %21 : vector<1x32xf32> to vector<8x32xf32>
    %23 = arith.addf %20, %22 : vector<8x32xf32>
    %c96 = arith.constant 96 : index
    %c0_11 = arith.constant 0 : index
    %24 = vector.load %arg1[%c96, %c0_11] : memref<856x128xf32, #tpu.memory_space<vmem>>, vector<32x32xf32>
    %cst_12 = arith.constant dense<0.000000e+00> : vector<8x32xf32>
    %25 = tpu.matmul %23, %24, %cst_12 {dimension_numbers = #tpu.dot_dimension_numbers<[1], [0], [0], [1], [0, 0, 1, 1], [], []>} : vector<8x32xf32>, vector<32x32xf32>, vector<8x32xf32> -> vector<8x32xf32>
    %c128 = arith.constant 128 : index
    %c0_13 = arith.constant 0 : index
    %26 = vector.load %arg1[%c128, %c0_13] : memref<856x128xf32, #tpu.memory_space<vmem>>, vector<1x32xf32>
    %27 = vector.broadcast %26 : vector<1x32xf32> to vector<8x32xf32>
    %28 = arith.addf %25, %27 : vector<8x32xf32>
    %29 = arith.addf %23, %28 : vector<8x32xf32>
    %c136 = arith.constant 136 : index
    %c0_14 = arith.constant 0 : index
    %30 = vector.load %arg1[%c136, %c0_14] : memref<856x128xf32, #tpu.memory_space<vmem>>, vector<1x32xf32>
    %c144 = arith.constant 144 : index
    %c0_15 = arith.constant 0 : index
    %31 = vector.load %arg1[%c144, %c0_15] : memref<856x128xf32, #tpu.memory_space<vmem>>, vector<1x32xf32>
    %cst_16 = arith.constant dense<0.000000e+00> : vector<8xf32>
    %32 = vector.multi_reduction <add>, %29, %cst_16 [1] : vector<8x32xf32> to vector<8xf32>
    %33 = vector.shape_cast %32 : vector<8xf32> to vector<8x1xf32>
    %cst_17 = arith.constant 3.200000e+01 : f32
    %34 = vector.broadcast %cst_17 : f32 to vector<8x1xf32>
    %35 = arith.divf %33, %34 : vector<8x1xf32>
    %36 = vector.broadcast %35 : vector<8x1xf32> to vector<8x32xf32>
    %37 = arith.subf %29, %36 : vector<8x32xf32>
    %38 = arith.mulf %37, %37 : vector<8x32xf32>
    %cst_18 = arith.constant dense<0.000000e+00> : vector<8xf32>
    %39 = vector.multi_reduction <add>, %38, %cst_18 [1] : vector<8x32xf32> to vector<8xf32>
    %40 = vector.shape_cast %39 : vector<8xf32> to vector<8x1xf32>
    %cst_19 = arith.constant 3.200000e+01 : f32
    %41 = vector.broadcast %cst_19 : f32 to vector<8x1xf32>
    %42 = arith.divf %40, %41 : vector<8x1xf32>
    %43 = vector.broadcast %35 : vector<8x1xf32> to vector<8x32xf32>
    %44 = arith.subf %29, %43 : vector<8x32xf32>
    %cst_20 = arith.constant 9.99999974E-6 : f32
    %45 = vector.broadcast %cst_20 : f32 to vector<8x1xf32>
    %46 = arith.addf %42, %45 : vector<8x1xf32>
    %47 = math.rsqrt %46 : vector<8x1xf32>
    %48 = vector.broadcast %47 : vector<8x1xf32> to vector<8x32xf32>
    %49 = arith.mulf %44, %48 : vector<8x32xf32>
    %50 = vector.broadcast %30 : vector<1x32xf32> to vector<8x32xf32>
    %51 = arith.mulf %49, %50 : vector<8x32xf32>
    %52 = vector.broadcast %31 : vector<1x32xf32> to vector<8x32xf32>
    %53 = arith.addf %51, %52 : vector<8x32xf32>
    %c152 = arith.constant 152 : index
    %c0_21 = arith.constant 0 : index
    %54 = vector.load %arg1[%c152, %c0_21] : memref<856x128xf32, #tpu.memory_space<vmem>>, vector<32x128xf32>
    %cst_22 = arith.constant dense<0.000000e+00> : vector<8x128xf32>
    %55 = tpu.matmul %53, %54, %cst_22 {dimension_numbers = #tpu.dot_dimension_numbers<[1], [0], [0], [1], [0, 0, 1, 1], [], []>} : vector<8x32xf32>, vector<32x128xf32>, vector<8x128xf32> -> vector<8x128xf32>
    %c184 = arith.constant 184 : index
    %c0_23 = arith.constant 0 : index
    %56 = vector.load %arg1[%c184, %c0_23] : memref<856x128xf32, #tpu.memory_space<vmem>>, vector<1x128xf32>
    %57 = vector.broadcast %56 : vector<1x128xf32> to vector<8x128xf32>
    %58 = arith.addf %55, %57 : vector<8x128xf32>
    %59 = arith.mulf %58, %58 : vector<8x128xf32>
    %60 = arith.mulf %58, %59 : vector<8x128xf32>
    %cst_24 = arith.constant 4.471500e-02 : f32
    %61 = vector.broadcast %cst_24 : f32 to vector<8x128xf32>
    %62 = arith.mulf %61, %60 : vector<8x128xf32>
    %63 = arith.addf %58, %62 : vector<8x128xf32>
    %cst_25 = arith.constant 0.797884583 : f32
    %64 = vector.broadcast %cst_25 : f32 to vector<8x128xf32>
    %65 = arith.mulf %64, %63 : vector<8x128xf32>
    %66 = math.tanh %65 : vector<8x128xf32>
    %cst_26 = arith.constant 1.000000e+00 : f32
    %67 = vector.broadcast %cst_26 : f32 to vector<8x128xf32>
    %68 = arith.addf %67, %66 : vector<8x128xf32>
    %cst_27 = arith.constant 5.000000e-01 : f32
    %69 = vector.broadcast %cst_27 : f32 to vector<8x128xf32>
    %70 = arith.mulf %69, %68 : vector<8x128xf32>
    %71 = arith.mulf %58, %70 : vector<8x128xf32>
    %c192 = arith.constant 192 : index
    %c0_28 = arith.constant 0 : index
    %72 = vector.load %arg1[%c192, %c0_28] : memref<856x128xf32, #tpu.memory_space<vmem>>, vector<128x32xf32>
    %cst_29 = arith.constant dense<0.000000e+00> : vector<8x32xf32>
    %73 = tpu.matmul %71, %72, %cst_29 {dimension_numbers = #tpu.dot_dimension_numbers<[1], [0], [0], [1], [0, 0, 1, 1], [], []>} : vector<8x128xf32>, vector<128x32xf32>, vector<8x32xf32> -> vector<8x32xf32>
    %c320 = arith.constant 320 : index
    %c0_30 = arith.constant 0 : index
    %74 = vector.load %arg1[%c320, %c0_30] : memref<856x128xf32, #tpu.memory_space<vmem>>, vector<1x32xf32>
    %75 = vector.broadcast %74 : vector<1x32xf32> to vector<8x32xf32>
    %76 = arith.addf %73, %75 : vector<8x32xf32>
    %77 = arith.addf %53, %76 : vector<8x32xf32>
    %c328 = arith.constant 328 : index
    %c0_31 = arith.constant 0 : index
    %78 = vector.load %arg1[%c328, %c0_31] : memref<856x128xf32, #tpu.memory_space<vmem>>, vector<1x32xf32>
    %c336 = arith.constant 336 : index
    %c0_32 = arith.constant 0 : index
    %79 = vector.load %arg1[%c336, %c0_32] : memref<856x128xf32, #tpu.memory_space<vmem>>, vector<1x32xf32>
    %cst_33 = arith.constant dense<0.000000e+00> : vector<8xf32>
    %80 = vector.multi_reduction <add>, %77, %cst_33 [1] : vector<8x32xf32> to vector<8xf32>
    %81 = vector.shape_cast %80 : vector<8xf32> to vector<8x1xf32>
    %cst_34 = arith.constant 3.200000e+01 : f32
    %82 = vector.broadcast %cst_34 : f32 to vector<8x1xf32>
    %83 = arith.divf %81, %82 : vector<8x1xf32>
    %84 = vector.broadcast %83 : vector<8x1xf32> to vector<8x32xf32>
    %85 = arith.subf %77, %84 : vector<8x32xf32>
    %86 = arith.mulf %85, %85 : vector<8x32xf32>
    %cst_35 = arith.constant dense<0.000000e+00> : vector<8xf32>
    %87 = vector.multi_reduction <add>, %86, %cst_35 [1] : vector<8x32xf32> to vector<8xf32>
    %88 = vector.shape_cast %87 : vector<8xf32> to vector<8x1xf32>
    %cst_36 = arith.constant 3.200000e+01 : f32
    %89 = vector.broadcast %cst_36 : f32 to vector<8x1xf32>
    %90 = arith.divf %88, %89 : vector<8x1xf32>
    %91 = vector.broadcast %83 : vector<8x1xf32> to vector<8x32xf32>
    %92 = arith.subf %77, %91 : vector<8x32xf32>
    %cst_37 = arith.constant 9.99999974E-6 : f32
    %93 = vector.broadcast %cst_37 : f32 to vector<8x1xf32>
    %94 = arith.addf %90, %93 : vector<8x1xf32>
    %95 = math.rsqrt %94 : vector<8x1xf32>
    %96 = vector.broadcast %95 : vector<8x1xf32> to vector<8x32xf32>
    %97 = arith.mulf %92, %96 : vector<8x32xf32>
    %98 = vector.broadcast %78 : vector<1x32xf32> to vector<8x32xf32>
    %99 = arith.mulf %97, %98 : vector<8x32xf32>
    %100 = vector.broadcast %79 : vector<1x32xf32> to vector<8x32xf32>
    %101 = arith.addf %99, %100 : vector<8x32xf32>
    %c344 = arith.constant 344 : index
    %c0_38 = arith.constant 0 : index
    %102 = vector.load %arg1[%c344, %c0_38] : memref<856x128xf32, #tpu.memory_space<vmem>>, vector<32x64xf32>
    %cst_39 = arith.constant dense<0.000000e+00> : vector<8x64xf32>
    %103 = tpu.matmul %101, %102, %cst_39 {dimension_numbers = #tpu.dot_dimension_numbers<[1], [0], [0], [1], [0, 0, 1, 1], [], []>} : vector<8x32xf32>, vector<32x64xf32>, vector<8x64xf32> -> vector<8x64xf32>
    %c376 = arith.constant 376 : index
    %c0_40 = arith.constant 0 : index
    %104 = vector.load %arg1[%c376, %c0_40] : memref<856x128xf32, #tpu.memory_space<vmem>>, vector<1x64xf32>
    %105 = vector.broadcast %104 : vector<1x64xf32> to vector<8x64xf32>
    %106 = arith.addf %103, %105 : vector<8x64xf32>
    %107 = arith.negf %106 : vector<8x64xf32>
    %108 = math.exp %107 : vector<8x64xf32>
    %cst_41 = arith.constant 1.000000e+00 : f32
    %109 = vector.broadcast %cst_41 : f32 to vector<8x64xf32>
    %110 = arith.addf %109, %108 : vector<8x64xf32>
    %111 = arith.divf %109, %110 : vector<8x64xf32>
    %112 = arith.mulf %106, %111 : vector<8x64xf32>
    %c384 = arith.constant 384 : index
    %c0_42 = arith.constant 0 : index
    %113 = vector.load %arg1[%c384, %c0_42] : memref<856x128xf32, #tpu.memory_space<vmem>>, vector<64x32xf32>
    %cst_43 = arith.constant dense<0.000000e+00> : vector<8x32xf32>
    %114 = tpu.matmul %112, %113, %cst_43 {dimension_numbers = #tpu.dot_dimension_numbers<[1], [0], [0], [1], [0, 0, 1, 1], [], []>} : vector<8x64xf32>, vector<64x32xf32>, vector<8x32xf32> -> vector<8x32xf32>
    %c448 = arith.constant 448 : index
    %c0_44 = arith.constant 0 : index
    %115 = vector.load %arg1[%c448, %c0_44] : memref<856x128xf32, #tpu.memory_space<vmem>>, vector<1x32xf32>
    %116 = vector.broadcast %115 : vector<1x32xf32> to vector<8x32xf32>
    %117 = arith.addf %114, %116 : vector<8x32xf32>
    %118 = arith.addf %117, %101 : vector<8x32xf32>
    %c456 = arith.constant 456 : index
    %c0_45 = arith.constant 0 : index
    %119 = vector.load %arg1[%c456, %c0_45] : memref<856x128xf32, #tpu.memory_space<vmem>>, vector<32x32xf32>
    %cst_46 = arith.constant dense<0.000000e+00> : vector<8x32xf32>
    %120 = tpu.matmul %118, %119, %cst_46 {dimension_numbers = #tpu.dot_dimension_numbers<[1], [0], [0], [1], [0, 0, 1, 1], [], []>} : vector<8x32xf32>, vector<32x32xf32>, vector<8x32xf32> -> vector<8x32xf32>
    %c488 = arith.constant 488 : index
    %c0_47 = arith.constant 0 : index
    %121 = vector.load %arg1[%c488, %c0_47] : memref<856x128xf32, #tpu.memory_space<vmem>>, vector<1x32xf32>
    %122 = vector.broadcast %121 : vector<1x32xf32> to vector<8x32xf32>
    %123 = arith.addf %120, %122 : vector<8x32xf32>
    %124 = arith.addf %118, %123 : vector<8x32xf32>
    %c496 = arith.constant 496 : index
    %c0_48 = arith.constant 0 : index
    %125 = vector.load %arg1[%c496, %c0_48] : memref<856x128xf32, #tpu.memory_space<vmem>>, vector<1x32xf32>
    %c504 = arith.constant 504 : index
    %c0_49 = arith.constant 0 : index
    %126 = vector.load %arg1[%c504, %c0_49] : memref<856x128xf32, #tpu.memory_space<vmem>>, vector<1x32xf32>
    %cst_50 = arith.constant dense<0.000000e+00> : vector<8xf32>
    %127 = vector.multi_reduction <add>, %124, %cst_50 [1] : vector<8x32xf32> to vector<8xf32>
    %128 = vector.shape_cast %127 : vector<8xf32> to vector<8x1xf32>
    %cst_51 = arith.constant 3.200000e+01 : f32
    %129 = vector.broadcast %cst_51 : f32 to vector<8x1xf32>
    %130 = arith.divf %128, %129 : vector<8x1xf32>
    %131 = vector.broadcast %130 : vector<8x1xf32> to vector<8x32xf32>
    %132 = arith.subf %124, %131 : vector<8x32xf32>
    %133 = arith.mulf %132, %132 : vector<8x32xf32>
    %cst_52 = arith.constant dense<0.000000e+00> : vector<8xf32>
    %134 = vector.multi_reduction <add>, %133, %cst_52 [1] : vector<8x32xf32> to vector<8xf32>
    %135 = vector.shape_cast %134 : vector<8xf32> to vector<8x1xf32>
    %cst_53 = arith.constant 3.200000e+01 : f32
    %136 = vector.broadcast %cst_53 : f32 to vector<8x1xf32>
    %137 = arith.divf %135, %136 : vector<8x1xf32>
    %138 = vector.broadcast %130 : vector<8x1xf32> to vector<8x32xf32>
    %139 = arith.subf %124, %138 : vector<8x32xf32>
    %cst_54 = arith.constant 9.99999974E-6 : f32
    %140 = vector.broadcast %cst_54 : f32 to vector<8x1xf32>
    %141 = arith.addf %137, %140 : vector<8x1xf32>
    %142 = math.rsqrt %141 : vector<8x1xf32>
    %143 = vector.broadcast %142 : vector<8x1xf32> to vector<8x32xf32>
    %144 = arith.mulf %139, %143 : vector<8x32xf32>
    %145 = vector.broadcast %125 : vector<1x32xf32> to vector<8x32xf32>
    %146 = arith.mulf %144, %145 : vector<8x32xf32>
    %147 = vector.broadcast %126 : vector<1x32xf32> to vector<8x32xf32>
    %148 = arith.addf %146, %147 : vector<8x32xf32>
    %c512 = arith.constant 512 : index
    %c0_55 = arith.constant 0 : index
    %149 = vector.load %arg1[%c512, %c0_55] : memref<856x128xf32, #tpu.memory_space<vmem>>, vector<32x128xf32>
    %cst_56 = arith.constant dense<0.000000e+00> : vector<8x128xf32>
    %150 = tpu.matmul %148, %149, %cst_56 {dimension_numbers = #tpu.dot_dimension_numbers<[1], [0], [0], [1], [0, 0, 1, 1], [], []>} : vector<8x32xf32>, vector<32x128xf32>, vector<8x128xf32> -> vector<8x128xf32>
    %c544 = arith.constant 544 : index
    %c0_57 = arith.constant 0 : index
    %151 = vector.load %arg1[%c544, %c0_57] : memref<856x128xf32, #tpu.memory_space<vmem>>, vector<1x128xf32>
    %152 = vector.broadcast %151 : vector<1x128xf32> to vector<8x128xf32>
    %153 = arith.addf %150, %152 : vector<8x128xf32>
    %154 = arith.mulf %153, %153 : vector<8x128xf32>
    %155 = arith.mulf %153, %154 : vector<8x128xf32>
    %cst_58 = arith.constant 4.471500e-02 : f32
    %156 = vector.broadcast %cst_58 : f32 to vector<8x128xf32>
    %157 = arith.mulf %156, %155 : vector<8x128xf32>
    %158 = arith.addf %153, %157 : vector<8x128xf32>
    %cst_59 = arith.constant 0.797884583 : f32
    %159 = vector.broadcast %cst_59 : f32 to vector<8x128xf32>
    %160 = arith.mulf %159, %158 : vector<8x128xf32>
    %161 = math.tanh %160 : vector<8x128xf32>
    %cst_60 = arith.constant 1.000000e+00 : f32
    %162 = vector.broadcast %cst_60 : f32 to vector<8x128xf32>
    %163 = arith.addf %162, %161 : vector<8x128xf32>
    %cst_61 = arith.constant 5.000000e-01 : f32
    %164 = vector.broadcast %cst_61 : f32 to vector<8x128xf32>
    %165 = arith.mulf %164, %163 : vector<8x128xf32>
    %166 = arith.mulf %153, %165 : vector<8x128xf32>
    %c552 = arith.constant 552 : index
    %c0_62 = arith.constant 0 : index
    %167 = vector.load %arg1[%c552, %c0_62] : memref<856x128xf32, #tpu.memory_space<vmem>>, vector<128x32xf32>
    %cst_63 = arith.constant dense<0.000000e+00> : vector<8x32xf32>
    %168 = tpu.matmul %166, %167, %cst_63 {dimension_numbers = #tpu.dot_dimension_numbers<[1], [0], [0], [1], [0, 0, 1, 1], [], []>} : vector<8x128xf32>, vector<128x32xf32>, vector<8x32xf32> -> vector<8x32xf32>
    %c680 = arith.constant 680 : index
    %c0_64 = arith.constant 0 : index
    %169 = vector.load %arg1[%c680, %c0_64] : memref<856x128xf32, #tpu.memory_space<vmem>>, vector<1x32xf32>
    %170 = vector.broadcast %169 : vector<1x32xf32> to vector<8x32xf32>
    %171 = arith.addf %168, %170 : vector<8x32xf32>
    %172 = arith.addf %148, %171 : vector<8x32xf32>
    %c688 = arith.constant 688 : index
    %c0_65 = arith.constant 0 : index
    %173 = vector.load %arg1[%c688, %c0_65] : memref<856x128xf32, #tpu.memory_space<vmem>>, vector<1x32xf32>
    %c696 = arith.constant 696 : index
    %c0_66 = arith.constant 0 : index
    %174 = vector.load %arg1[%c696, %c0_66] : memref<856x128xf32, #tpu.memory_space<vmem>>, vector<1x32xf32>
    %cst_67 = arith.constant dense<0.000000e+00> : vector<8xf32>
    %175 = vector.multi_reduction <add>, %172, %cst_67 [1] : vector<8x32xf32> to vector<8xf32>
    %176 = vector.shape_cast %175 : vector<8xf32> to vector<8x1xf32>
    %cst_68 = arith.constant 3.200000e+01 : f32
    %177 = vector.broadcast %cst_68 : f32 to vector<8x1xf32>
    %178 = arith.divf %176, %177 : vector<8x1xf32>
    %179 = vector.broadcast %178 : vector<8x1xf32> to vector<8x32xf32>
    %180 = arith.subf %172, %179 : vector<8x32xf32>
    %181 = arith.mulf %180, %180 : vector<8x32xf32>
    %cst_69 = arith.constant dense<0.000000e+00> : vector<8xf32>
    %182 = vector.multi_reduction <add>, %181, %cst_69 [1] : vector<8x32xf32> to vector<8xf32>
    %183 = vector.shape_cast %182 : vector<8xf32> to vector<8x1xf32>
    %cst_70 = arith.constant 3.200000e+01 : f32
    %184 = vector.broadcast %cst_70 : f32 to vector<8x1xf32>
    %185 = arith.divf %183, %184 : vector<8x1xf32>
    %186 = vector.broadcast %178 : vector<8x1xf32> to vector<8x32xf32>
    %187 = arith.subf %172, %186 : vector<8x32xf32>
    %cst_71 = arith.constant 9.99999974E-6 : f32
    %188 = vector.broadcast %cst_71 : f32 to vector<8x1xf32>
    %189 = arith.addf %185, %188 : vector<8x1xf32>
    %190 = math.rsqrt %189 : vector<8x1xf32>
    %191 = vector.broadcast %190 : vector<8x1xf32> to vector<8x32xf32>
    %192 = arith.mulf %187, %191 : vector<8x32xf32>
    %193 = vector.broadcast %173 : vector<1x32xf32> to vector<8x32xf32>
    %194 = arith.mulf %192, %193 : vector<8x32xf32>
    %195 = vector.broadcast %174 : vector<1x32xf32> to vector<8x32xf32>
    %196 = arith.addf %194, %195 : vector<8x32xf32>
    %c704 = arith.constant 704 : index
    %c0_72 = arith.constant 0 : index
    %197 = vector.load %arg1[%c704, %c0_72] : memref<856x128xf32, #tpu.memory_space<vmem>>, vector<32x64xf32>
    %cst_73 = arith.constant dense<0.000000e+00> : vector<8x64xf32>
    %198 = tpu.matmul %196, %197, %cst_73 {dimension_numbers = #tpu.dot_dimension_numbers<[1], [0], [0], [1], [0, 0, 1, 1], [], []>} : vector<8x32xf32>, vector<32x64xf32>, vector<8x64xf32> -> vector<8x64xf32>
    %c736 = arith.constant 736 : index
    %c0_74 = arith.constant 0 : index
    %199 = vector.load %arg1[%c736, %c0_74] : memref<856x128xf32, #tpu.memory_space<vmem>>, vector<1x64xf32>
    %200 = vector.broadcast %199 : vector<1x64xf32> to vector<8x64xf32>
    %201 = arith.addf %198, %200 : vector<8x64xf32>
    %202 = arith.negf %201 : vector<8x64xf32>
    %203 = math.exp %202 : vector<8x64xf32>
    %cst_75 = arith.constant 1.000000e+00 : f32
    %204 = vector.broadcast %cst_75 : f32 to vector<8x64xf32>
    %205 = arith.addf %204, %203 : vector<8x64xf32>
    %206 = arith.divf %204, %205 : vector<8x64xf32>
    %207 = arith.mulf %201, %206 : vector<8x64xf32>
    %c744 = arith.constant 744 : index
    %c0_76 = arith.constant 0 : index
    %208 = vector.load %arg1[%c744, %c0_76] : memref<856x128xf32, #tpu.memory_space<vmem>>, vector<64x32xf32>
    %cst_77 = arith.constant dense<0.000000e+00> : vector<8x32xf32>
    %209 = tpu.matmul %207, %208, %cst_77 {dimension_numbers = #tpu.dot_dimension_numbers<[1], [0], [0], [1], [0, 0, 1, 1], [], []>} : vector<8x64xf32>, vector<64x32xf32>, vector<8x32xf32> -> vector<8x32xf32>
    %c808 = arith.constant 808 : index
    %c0_78 = arith.constant 0 : index
    %210 = vector.load %arg1[%c808, %c0_78] : memref<856x128xf32, #tpu.memory_space<vmem>>, vector<1x32xf32>
    %211 = vector.broadcast %210 : vector<1x32xf32> to vector<8x32xf32>
    %212 = arith.addf %209, %211 : vector<8x32xf32>
    %213 = arith.addf %212, %196 : vector<8x32xf32>
    %c816 = arith.constant 816 : index
    %c0_79 = arith.constant 0 : index
    %214 = vector.load %arg1[%c816, %c0_79] : memref<856x128xf32, #tpu.memory_space<vmem>>, vector<32x128xf32>
    %cst_80 = arith.constant dense<0.000000e+00> : vector<8x128xf32>
    %215 = tpu.matmul %213, %214, %cst_80 {dimension_numbers = #tpu.dot_dimension_numbers<[1], [0], [0], [1], [0, 0, 1, 1], [], []>} : vector<8x32xf32>, vector<32x128xf32>, vector<8x128xf32> -> vector<8x128xf32>
    %c848 = arith.constant 848 : index
    %c0_81 = arith.constant 0 : index
    %216 = vector.load %arg1[%c848, %c0_81] : memref<856x128xf32, #tpu.memory_space<vmem>>, vector<1x128xf32>
    %217 = vector.broadcast %216 : vector<1x128xf32> to vector<8x128xf32>
    %218 = arith.addf %215, %217 : vector<8x128xf32>
    %c0_82 = arith.constant 0 : index
    %c0_83 = arith.constant 0 : index
    %219 = vector.load %arg2[%c0_82, %c0_83] : memref<8x128xf32, #tpu.memory_space<vmem>>, vector<8x128xf32>
    tpu.vector_store %arg2[%c0_82, %c0_83], %218 {strides = array<i32>} : memref<8x128xf32, #tpu.memory_space<vmem>>, vector<8x128xf32>,
    return
  }
}

</mosaic_0001>

<llo_original>
// kernel: forward.1
$region0: #{forward.1}
  #allocation0 [shape = 'u32[]', space=smem, size = 0x4, offset = 0x4, fixed_abs, tag = 'smem constant byte address 0x4 - core index']
  #allocation1 [shape = 'u32[144,128]{1,0:T(1,128)}', space=vmem, size = 0x12000, scoped, tag = 'internal scratch']
  %s0 = inlined_call_operand.hbm [shape: f32[8,16], index: 0, kind: input, shape index: {}]
  %s1 = inlined_call_operand.hbm [shape: f32[856,128], index: 1, kind: input, shape index: {}]
  %s2 = inlined_call_operand.vmem [shape: f32[8,128], index: 2, kind: output, shape index: {}]
  %s3 = sld [smem:[#allocation0]]
  $region26: #{forward.1} parent=0
    _
  %s5 = ssub.s32 1, %s3
  %s6 = scalar_select 0, %s5, %s3
  $region1: #{forward.1} parent=0
    #allocation2 [shape = 'u8[4096]{0}', space=vmem, size = 0x1000, scoped, tag = 'input window, operand 0, single buffered']
    #allocation3 [shape = 's32[1]{0}', space=sflag, size = 0x4, scoped, tag = 'scoped memory for forward.1']
    #allocation4 [shape = 'u8[438272]{0}', space=vmem, size = 0x6b000, scoped, tag = 'input window, operand 1, single buffered']
    #allocation5 [shape = 's32[1]{0}', space=sflag, size = 0x4, scoped, tag = 'scoped memory for forward.1']
    %7 = vsyncpa [#allocation3], 0
    %8 = vsyncpa [#allocation5], 0
    // Predicated region
    $region2: #{forward.1} parent=1 // pred_check
      _
    $region3: #{forward.1} parent=1 // pred_check_branch
      %10 = sbr.rel (0) target = $region5
    $region4: #{forward.1} parent=1 // pred_region
      %s12 = ssub.s32 128, 128
      %13 = vsyncadd [#allocation3], %s12
      %s15 = sshll.u32 [#allocation2], 4
      %s16 = int_to_ptr.vmem [resolvable:$true] %s15
      %18 = dma.hbm_to_vmem [thread:$0]  %s0, 128, %s16, [#allocation3]
    $region5: #{forward.1} parent=1 // pred_fallthru
      _
    // Predicated region
    $region6: #{forward.1} parent=1 // pred_check
      _
    $region7: #{forward.1} parent=1 // pred_check_branch
      %20 = sbr.rel (0) target = $region9
    $region8: #{forward.1} parent=1 // pred_region
      %s22 = ssub.s32 13696, 13696
      %23 = vsyncadd [#allocation5], %s22
      %s24 = sshll.u32 [#allocation4], 4
      %s25 = int_to_ptr.vmem [resolvable:$true] %s24
      %30 = dma.hbm_to_vmem [thread:$0]  %s1, 13696, %s25, [#allocation5], 128, 128, 8
    $region9: #{forward.1} parent=1 // pred_fallthru
      _
    // Predicated region
    $region10: #{forward.1} parent=1 // pred_check
      _
    $region11: #{forward.1} parent=1 // pred_check_branch
      %32 = sbr.rel (0) target = $region13
    $region12: #{forward.1} parent=1 // pred_region
      %33 = dma.done [#allocation3], 128
    $region13: #{forward.1} parent=1 // pred_fallthru
      _
    // Predicated region
    $region14: #{forward.1} parent=1 // pred_check
      _
    $region15: #{forward.1} parent=1 // pred_check_branch
      %35 = sbr.rel (0) target = $region17
    $region16: #{forward.1} parent=1 // pred_region
      %36 = dma.done [#allocation5], 13696
    $region17: #{forward.1} parent=1 // pred_fallthru
      _
    %v37 = vld [vmem:[#allocation2] sm:$0xff]
    %v38 = vld [vmem:[#allocation4] sm:$0xff]
    %v39 = vld [vmem:[#allocation4 + $0x8] sm:$0xff]
    %v40 = vld [vmem:[#allocation4 + $0x10] sm:$0x1]
    %v41 = vlaneseq
    %v42 = vshrl.u32 %v41, 7
    %v43 = vsub.s32 0, %v42
    %v44 = vrot.slane %v40, %v43
    %vm45 = vcmask 130048
    %v47 = vsel %vm45, %v37, 0
    %49 = vmatprep.subr.mxu0 0.0
    %50 = vmatpush1.msra.mxu0 0.0
    %51 = vmatprep.subr.mxu0 0.0
    %52 = vmatpush1.msra.mxu0 0.0
    %53 = vmatprep.subr.mxu0 0.0
    %54 = vmatpush1.msra.mxu0 0.0
    %55 = vmatprep.subr.mxu0 0.0
    %56 = vmatpush1.msra.mxu0 0.0
    %57 = vmatprep.subr.mxu0 0.0
    %58 = vmatpush1.msra.mxu0 0.0
    %59 = vmatprep.subr.mxu0 0.0
    %60 = vmatpush1.msra.mxu0 0.0
    %61 = vmatprep.subr.mxu0 0.0
    %62 = vmatpush1.msra.mxu0 0.0
    %63 = vmatprep.subr.mxu0 0.0
    %64 = vmatpush1.msra.mxu0 0.0
    %65 = vmatprep.subr.mxu0 0.0
    %66 = vmatpush1.msra.mxu0 0.0
    %67 = vmatprep.subr.mxu0 0.0
    %68 = vmatpush1.msra.mxu0 0.0
    %69 = vmatprep.subr.mxu0 0.0
    %70 = vmatpush1.msra.mxu0 0.0
    %71 = vmatprep.subr.mxu0 0.0
    %72 = vmatpush1.msra.mxu0 0.0
    %73 = vmatprep.subr.mxu0 0.0
    %74 = vmatpush1.msra.mxu0 0.0
    %75 = vmatprep.subr.mxu0 0.0
    %76 = vmatpush1.msra.mxu0 0.0
    %77 = vmatprep.subr.mxu0 0.0
    %78 = vmatpush1.msra.mxu0 %v39
    %79 = vmatprep.subr.mxu0 0.0
    %80 = vmatpush1.msra.mxu0 %v38
    %81 = vmatprep.subr.mxu0 0.0
    %82 = vmatpush2.msra.mxu0 0.0
    %83 = vmatprep.subr.mxu0 0.0
    %84 = vmatpush2.msra.mxu0 0.0
    %85 = vmatprep.subr.mxu0 0.0
    %86 = vmatpush2.msra.mxu0 0.0
    %87 = vmatprep.subr.mxu0 0.0
    %88 = vmatpush2.msra.mxu0 0.0
    %89 = vmatprep.subr.mxu0 0.0
    %90 = vmatpush2.msra.mxu0 0.0
    %91 = vmatprep.subr.mxu0 0.0
    %92 = vmatpush2.msra.mxu0 0.0
    %93 = vmatprep.subr.mxu0 0.0
    %94 = vmatpush2.msra.mxu0 0.0
    %95 = vmatprep.subr.mxu0 0.0
    %96 = vmatpush2.msra.mxu0 0.0
    %97 = vmatprep.subr.mxu0 0.0
    %98 = vmatpush2.msra.mxu0 0.0
    %99 = vmatprep.subr.mxu0 0.0
    %100 = vmatpush2.msra.mxu0 0.0
    %101 = vmatprep.subr.mxu0 0.0
    %102 = vmatpush2.msra.mxu0 0.0
    %103 = vmatprep.subr.mxu0 0.0
    %104 = vmatpush2.msra.mxu0 0.0
    %105 = vmatprep.subr.mxu0 0.0
    %106 = vmatpush2.msra.mxu0 0.0
    %107 = vmatprep.subr.mxu0 0.0
    %108 = vmatpush2.msra.mxu0 0.0
    %109 = vmatprep.subr.mxu0 0.0
    %110 = vmatpush2.msra.mxu0 0.0
    %111 = vmatprep.subr.mxu0 0.0
    %112 = vmatpush2.msra.mxu0 0.0
    %113 = vmatprep.mubr.f32.mxu0 0.0
    %114 = vmatmul.mubr.f32.gmra.mxu0 %v47
    %v115 = vpop.f32.mrf.mxu0
    %v116 = vadd.f32 %v44, %v115
    %v117 = vpop.f32.mrf.mxu0
    %118 = vdwg.mxu0
    %v119 = vmul.f32 %v116, %v116
    %v120 = vmul.f32 %v116, %v119
    %v121 = vmul.f32 %v120, 0.044715
    %v122 = vadd.f32 %v116, %v121
    %v123 = vmul.f32 %v122, 0.7978846
    %v124 = vtanh.pop %v123
    %v125 = vadd.f32 %v124, 1.0
    %v126 = vmul.f32 %v125, 0.5
    %v127 = vmul.f32 %v116, %v126
    %v128 = vld [vmem:[#allocation4 + $0x18] sm:$0xff]
    %v129 = vld [vmem:[#allocation4 + $0x20] sm:$0xff]
    %v130 = vld [vmem:[#allocation4 + $0x28] sm:$0xff]
    %v131 = vld [vmem:[#allocation4 + $0x30] sm:$0xff]
    %v132 = vld [vmem:[#allocation4 + $0x38] sm:$0xff]
    %v133 = vld [vmem:[#allocation4 + $0x40] sm:$0xff]
    %v134 = vld [vmem:[#allocation4 + $0x48] sm:$0xff]
    %v135 = vld [vmem:[#allocation4 + $0x50] sm:$0xff]
    %v136 = vld [vmem:[#allocation4 + $0x58] sm:$0x1]
    %v137 = vlaneseq
    %v138 = vshrl.u32 %v137, 7
    %v139 = vsub.s32 0, %v138
    %v140 = vrot.slane %v136, %v139
    %vm141 = vcmask 523264
    %v143 = vsel %vm141, %v127, 0
    %145 = vmatprep.subr.mxu0 0.0
    %146 = vmatpush1.msra.mxu0 0.0
    %147 = vmatprep.subr.mxu0 0.0
    %148 = vmatpush1.msra.mxu0 0.0
    %149 = vmatprep.subr.mxu0 0.0
    %150 = vmatpush1.msra.mxu0 0.0
    %151 = vmatprep.subr.mxu0 0.0
    %152 = vmatpush1.msra.mxu0 0.0
    %153 = vmatprep.subr.mxu0 0.0
    %154 = vmatpush1.msra.mxu0 0.0
    %155 = vmatprep.subr.mxu0 0.0
    %156 = vmatpush1.msra.mxu0 0.0
    %157 = vmatprep.subr.mxu0 0.0
    %158 = vmatpush1.msra.mxu0 0.0
    %159 = vmatprep.subr.mxu0 0.0
    %160 = vmatpush1.msra.mxu0 0.0
    %161 = vmatprep.subr.mxu0 0.0
    %162 = vmatpush1.msra.mxu0 %v135
    %163 = vmatprep.subr.mxu0 0.0
    %164 = vmatpush1.msra.mxu0 %v134
    %165 = vmatprep.subr.mxu0 0.0
    %166 = vmatpush1.msra.mxu0 %v133
    %167 = vmatprep.subr.mxu0 0.0
    %168 = vmatpush1.msra.mxu0 %v132
    %169 = vmatprep.subr.mxu0 0.0
    %170 = vmatpush1.msra.mxu0 %v131
    %171 = vmatprep.subr.mxu0 0.0
    %172 = vmatpush1.msra.mxu0 %v130
    %173 = vmatprep.subr.mxu0 0.0
    %174 = vmatpush1.msra.mxu0 %v129
    %175 = vmatprep.subr.mxu0 0.0
    %176 = vmatpush1.msra.mxu0 %v128
    %177 = vmatprep.subr.mxu0 0.0
    %178 = vmatpush2.msra.mxu0 0.0
    %179 = vmatprep.subr.mxu0 0.0
    %180 = vmatpush2.msra.mxu0 0.0
    %181 = vmatprep.subr.mxu0 0.0
    %182 = vmatpush2.msra.mxu0 0.0
    %183 = vmatprep.subr.mxu0 0.0
    %184 = vmatpush2.msra.mxu0 0.0
    %185 = vmatprep.subr.mxu0 0.0
    %186 = vmatpush2.msra.mxu0 0.0
    %187 = vmatprep.subr.mxu0 0.0
    %188 = vmatpush2.msra.mxu0 0.0
    %189 = vmatprep.subr.mxu0 0.0
    %190 = vmatpush2.msra.mxu0 0.0
    %191 = vmatprep.subr.mxu0 0.0
    %192 = vmatpush2.msra.mxu0 0.0
    %193 = vmatprep.subr.mxu0 0.0
    %194 = vmatpush2.msra.mxu0 0.0
    %195 = vmatprep.subr.mxu0 0.0
    %196 = vmatpush2.msra.mxu0 0.0
    %197 = vmatprep.subr.mxu0 0.0
    %198 = vmatpush2.msra.mxu0 0.0
    %199 = vmatprep.subr.mxu0 0.0
    %200 = vmatpush2.msra.mxu0 0.0
    %201 = vmatprep.subr.mxu0 0.0
    %202 = vmatpush2.msra.mxu0 0.0
    %203 = vmatprep.subr.mxu0 0.0
    %204 = vmatpush2.msra.mxu0 0.0
    %205 = vmatprep.subr.mxu0 0.0
    %206 = vmatpush2.msra.mxu0 0.0
    %207 = vmatprep.subr.mxu0 0.0
    %208 = vmatpush2.msra.mxu0 0.0
    %209 = vmatprep.mubr.f32.mxu0 0.0
    %210 = vmatmul.mubr.f32.gmra.mxu0 %v143
    %v211 = vpop.f32.mrf.mxu0
    %v212 = vadd.f32 %v140, %v211
    %v213 = vpop.f32.mrf.mxu0
    %214 = vdwg.mxu0
    %v215 = vld [vmem:[#allocation4 + $0x60] sm:$0xff]
    %v216 = vld [vmem:[#allocation4 + $0x68] sm:$0xff]
    %v217 = vld [vmem:[#allocation4 + $0x70] sm:$0xff]
    %v218 = vld [vmem:[#allocation4 + $0x78] sm:$0xff]
    %v219 = vld [vmem:[#allocation4 + $0x80] sm:$0x1]
    %v220 = vlaneseq
    %v221 = vshrl.u32 %v220, 7
    %v222 = vsub.s32 0, %v221
    %v223 = vrot.slane %v219, %v222
    %vm224 = vcmask 261120
    %v226 = vsel %vm224, %v212, 0
    %228 = vmatprep.subr.mxu0 0.0
    %229 = vmatpush1.msra.mxu0 0.0
    %230 = vmatprep.subr.mxu0 0.0
    %231 = vmatpush1.msra.mxu0 0.0
    %232 = vmatprep.subr.mxu0 0.0
    %233 = vmatpush1.msra.mxu0 0.0
    %234 = vmatprep.subr.mxu0 0.0
    %235 = vmatpush1.msra.mxu0 0.0
    %236 = vmatprep.subr.mxu0 0.0
    %237 = vmatpush1.msra.mxu0 0.0
    %238 = vmatprep.subr.mxu0 0.0
    %239 = vmatpush1.msra.mxu0 0.0
    %240 = vmatprep.subr.mxu0 0.0
    %241 = vmatpush1.msra.mxu0 0.0
    %242 = vmatprep.subr.mxu0 0.0
    %243 = vmatpush1.msra.mxu0 0.0
    %244 = vmatprep.subr.mxu0 0.0
    %245 = vmatpush1.msra.mxu0 0.0
    %246 = vmatprep.subr.mxu0 0.0
    %247 = vmatpush1.msra.mxu0 0.0
    %248 = vmatprep.subr.mxu0 0.0
    %249 = vmatpush1.msra.mxu0 0.0
    %250 = vmatprep.subr.mxu0 0.0
    %251 = vmatpush1.msra.mxu0 0.0
    %252 = vmatprep.subr.mxu0 0.0
    %253 = vmatpush1.msra.mxu0 %v218
    %254 = vmatprep.subr.mxu0 0.0
    %255 = vmatpush1.msra.mxu0 %v217
    %256 = vmatprep.subr.mxu0 0.0
    %257 = vmatpush1.msra.mxu0 %v216
    %258 = vmatprep.subr.mxu0 0.0
    %259 = vmatpush1.msra.mxu0 %v215
    %260 = vmatprep.subr.mxu0 0.0
    %261 = vmatpush2.msra.mxu0 0.0
    %262 = vmatprep.subr.mxu0 0.0
    %263 = vmatpush2.msra.mxu0 0.0
    %264 = vmatprep.subr.mxu0 0.0
    %265 = vmatpush2.msra.mxu0 0.0
    %266 = vmatprep.subr.mxu0 0.0
    %267 = vmatpush2.msra.mxu0 0.0
    %268 = vmatprep.subr.mxu0 0.0
    %269 = vmatpush2.msra.mxu0 0.0
    %270 = vmatprep.subr.mxu0 0.0
    %271 = vmatpush2.msra.mxu0 0.0
    %272 = vmatprep.subr.mxu0 0.0
    %273 = vmatpush2.msra.mxu0 0.0
    %274 = vmatprep.subr.mxu0 0.0
    %275 = vmatpush2.msra.mxu0 0.0
    %276 = vmatprep.subr.mxu0 0.0
    %277 = vmatpush2.msra.mxu0 0.0
    %278 = vmatprep.subr.mxu0 0.0
    %279 = vmatpush2.msra.mxu0 0.0
    %280 = vmatprep.subr.mxu0 0.0
    %281 = vmatpush2.msra.mxu0 0.0
    %282 = vmatprep.subr.mxu0 0.0
    %283 = vmatpush2.msra.mxu0 0.0
    %284 = vmatprep.subr.mxu0 0.0
    %285 = vmatpush2.msra.mxu0 0.0
    %286 = vmatprep.subr.mxu0 0.0
    %287 = vmatpush2.msra.mxu0 0.0
    %288 = vmatprep.subr.mxu0 0.0
    %289 = vmatpush2.msra.mxu0 0.0
    %290 = vmatprep.subr.mxu0 0.0
    %291 = vmatpush2.msra.mxu0 0.0
    %292 = vmatprep.mubr.f32.mxu0 0.0
    %293 = vmatmul.mubr.f32.gmra.mxu0 %v226
    %v294 = vpop.f32.mrf.mxu0
    %v295 = vadd.f32 %v223, %v294
    %v296 = vpop.f32.mrf.mxu0
    %297 = vdwg.mxu0
    %v298 = vadd.f32 %v212, %v295
    %v299 = vld [vmem:[#allocation4 + $0x88] sm:$0x1]
    %v300 = vld [vmem:[#allocation4 + $0x90] sm:$0x1]
    %v301 = vsel %vm224, %v298, 0.0
    %302 = vadd.xlane.f32.xlu0 %v301
    %v303 = vpop.xlane.xlu0 %302
    %v304 = vrcp.pop 32.0
    %v305 = vmul.f32 %v303, %v304
    %v306 = vsub.f32 %v298, %v305
    %v307 = vmul.f32 %v306, %v306
    %v308 = vsel %vm224, %v307, 0.0
    %309 = vadd.xlane.f32.xlu0 %v308
    %v310 = vpop.xlane.xlu0 %309
    %v311 = vmul.f32 %v310, %v304
    %v312 = vadd.f32 %v311, 1e-05
    %v313 = vrsqrt.pop %v312
    %v314 = vmul.f32 %v306, %v313
    %v315 = vlaneseq
    %v316 = vshrl.u32 %v315, 7
    %v317 = vsub.s32 0, %v316
    %v318 = vrot.slane %v299, %v317
    %v319 = vmul.f32 %v314, %v318
    %v320 = vlaneseq
    %v321 = vshrl.u32 %v320, 7
    %v322 = vsub.s32 0, %v321
    %v323 = vrot.slane %v300, %v322
    %v324 = vadd.f32 %v319, %v323
    %v325 = vld [vmem:[#allocation4 + $0x98] sm:$0xff]
    %v326 = vld [vmem:[#allocation4 + $0xa0] sm:$0xff]
    %v327 = vld [vmem:[#allocation4 + $0xa8] sm:$0xff]
    %v328 = vld [vmem:[#allocation4 + $0xb0] sm:$0xff]
    %v329 = vld [vmem:[#allocation4 + $0xb8] sm:$0x1]
    %v330 = vlaneseq
    %v331 = vshrl.u32 %v330, 7
    %v332 = vsub.s32 0, %v331
    %v333 = vrot.slane %v329, %v332
    %v335 = vsel %vm224, %v324, 0
    %337 = vmatprep.subr.mxu0 0.0
    %338 = vmatpush1.msra.mxu0 0.0
    %339 = vmatprep.subr.mxu0 0.0
    %340 = vmatpush1.msra.mxu0 0.0
    %341 = vmatprep.subr.mxu0 0.0
    %342 = vmatpush1.msra.mxu0 0.0
    %343 = vmatprep.subr.mxu0 0.0
    %344 = vmatpush1.msra.mxu0 0.0
    %345 = vmatprep.subr.mxu0 0.0
    %346 = vmatpush1.msra.mxu0 0.0
    %347 = vmatprep.subr.mxu0 0.0
    %348 = vmatpush1.msra.mxu0 0.0
    %349 = vmatprep.subr.mxu0 0.0
    %350 = vmatpush1.msra.mxu0 0.0
    %351 = vmatprep.subr.mxu0 0.0
    %352 = vmatpush1.msra.mxu0 0.0
    %353 = vmatprep.subr.mxu0 0.0
    %354 = vmatpush1.msra.mxu0 0.0
    %355 = vmatprep.subr.mxu0 0.0
    %356 = vmatpush1.msra.mxu0 0.0
    %357 = vmatprep.subr.mxu0 0.0
    %358 = vmatpush1.msra.mxu0 0.0
    %359 = vmatprep.subr.mxu0 0.0
    %360 = vmatpush1.msra.mxu0 0.0
    %361 = vmatprep.subr.mxu0 0.0
    %362 = vmatpush1.msra.mxu0 %v328
    %363 = vmatprep.subr.mxu0 0.0
    %364 = vmatpush1.msra.mxu0 %v327
    %365 = vmatprep.subr.mxu0 0.0
    %366 = vmatpush1.msra.mxu0 %v326
    %367 = vmatprep.subr.mxu0 0.0
    %368 = vmatpush1.msra.mxu0 %v325
    %369 = vmatprep.subr.mxu0 0.0
    %370 = vmatpush2.msra.mxu0 0.0
    %371 = vmatprep.subr.mxu0 0.0
    %372 = vmatpush2.msra.mxu0 0.0
    %373 = vmatprep.subr.mxu0 0.0
    %374 = vmatpush2.msra.mxu0 0.0
    %375 = vmatprep.subr.mxu0 0.0
    %376 = vmatpush2.msra.mxu0 0.0
    %377 = vmatprep.subr.mxu0 0.0
    %378 = vmatpush2.msra.mxu0 0.0
    %379 = vmatprep.subr.mxu0 0.0
    %380 = vmatpush2.msra.mxu0 0.0
    %381 = vmatprep.subr.mxu0 0.0
    %382 = vmatpush2.msra.mxu0 0.0
    %383 = vmatprep.subr.mxu0 0.0
    %384 = vmatpush2.msra.mxu0 0.0
    %385 = vmatprep.subr.mxu0 0.0
    %386 = vmatpush2.msra.mxu0 0.0
    %387 = vmatprep.subr.mxu0 0.0
    %388 = vmatpush2.msra.mxu0 0.0
    %389 = vmatprep.subr.mxu0 0.0
    %390 = vmatpush2.msra.mxu0 0.0
    %391 = vmatprep.subr.mxu0 0.0
    %392 = vmatpush2.msra.mxu0 0.0
    %393 = vmatprep.subr.mxu0 0.0
    %394 = vmatpush2.msra.mxu0 0.0
    %395 = vmatprep.subr.mxu0 0.0
    %396 = vmatpush2.msra.mxu0 0.0
    %397 = vmatprep.subr.mxu0 0.0
    %398 = vmatpush2.msra.mxu0 0.0
    %399 = vmatprep.subr.mxu0 0.0
    %400 = vmatpush2.msra.mxu0 0.0
    %401 = vmatprep.mubr.f32.mxu0 0.0
    %402 = vmatmul.mubr.f32.gmra.mxu0 %v335
    %v403 = vpop.f32.mrf.mxu0
    %v404 = vadd.f32 %v333, %v403
    %v405 = vpop.f32.mrf.mxu0
    %406 = vdwg.mxu0
    %v407 = vmul.f32 %v404, %v404
    %v408 = vmul.f32 %v404, %v407
    %v409 = vmul.f32 %v408, 0.044715
    %v410 = vadd.f32 %v404, %v409
    %v411 = vmul.f32 %v410, 0.7978846
    %v412 = vtanh.pop %v411
    %v413 = vadd.f32 %v412, 1.0
    %v414 = vmul.f32 %v413, 0.5
    %v415 = vmul.f32 %v404, %v414
    %v416 = vld [vmem:[#allocation4 + $0xc0] sm:$0xff]
    %v417 = vld [vmem:[#allocation4 + $0xc8] sm:$0xff]
    %v418 = vld [vmem:[#allocation4 + $0xd0] sm:$0xff]
    %v419 = vld [vmem:[#allocation4 + $0xd8] sm:$0xff]
    %v420 = vld [vmem:[#allocation4 + $0xe0] sm:$0xff]
    %v421 = vld [vmem:[#allocation4 + $0xe8] sm:$0xff]
    %v422 = vld [vmem:[#allocation4 + $0xf0] sm:$0xff]
    %v423 = vld [vmem:[#allocation4 + $0xf8] sm:$0xff]
    %v424 = vld [vmem:[#allocation4 + $0x100] sm:$0xff]
    %v425 = vld [vmem:[#allocation4 + $0x108] sm:$0xff]
    %v426 = vld [vmem:[#allocation4 + $0x110] sm:$0xff]
    %v427 = vld [vmem:[#allocation4 + $0x118] sm:$0xff]
    %v428 = vld [vmem:[#allocation4 + $0x120] sm:$0xff]
    %v429 = vld [vmem:[#allocation4 + $0x128] sm:$0xff]
    %v430 = vld [vmem:[#allocation4 + $0x130] sm:$0xff]
    %v431 = vld [vmem:[#allocation4 + $0x138] sm:$0xff]
    %v432 = vld [vmem:[#allocation4 + $0x140] sm:$0x1]
    %v433 = vlaneseq
    %v434 = vshrl.u32 %v433, 7
    %v435 = vsub.s32 0, %v434
    %v436 = vrot.slane %v432, %v435
    %437 = vmatprep.subr.mxu0 0.0
    %438 = vmatpush1.msra.mxu0 %v431
    %439 = vmatprep.subr.mxu0 0.0
    %440 = vmatpush1.msra.mxu0 %v430
    %441 = vmatprep.subr.mxu0 0.0
    %442 = vmatpush1.msra.mxu0 %v429
    %443 = vmatprep.subr.mxu0 0.0
    %444 = vmatpush1.msra.mxu0 %v428
    %445 = vmatprep.subr.mxu0 0.0
    %446 = vmatpush1.msra.mxu0 %v427
    %447 = vmatprep.subr.mxu0 0.0
    %448 = vmatpush1.msra.mxu0 %v426
    %449 = vmatprep.subr.mxu0 0.0
    %450 = vmatpush1.msra.mxu0 %v425
    %451 = vmatprep.subr.mxu0 0.0
    %452 = vmatpush1.msra.mxu0 %v424
    %453 = vmatprep.subr.mxu0 0.0
    %454 = vmatpush1.msra.mxu0 %v423
    %455 = vmatprep.subr.mxu0 0.0
    %456 = vmatpush1.msra.mxu0 %v422
    %457 = vmatprep.subr.mxu0 0.0
    %458 = vmatpush1.msra.mxu0 %v421
    %459 = vmatprep.subr.mxu0 0.0
    %460 = vmatpush1.msra.mxu0 %v420
    %461 = vmatprep.subr.mxu0 0.0
    %462 = vmatpush1.msra.mxu0 %v419
    %463 = vmatprep.subr.mxu0 0.0
    %464 = vmatpush1.msra.mxu0 %v418
    %465 = vmatprep.subr.mxu0 0.0
    %466 = vmatpush1.msra.mxu0 %v417
    %467 = vmatprep.subr.mxu0 0.0
    %468 = vmatpush1.msra.mxu0 %v416
    %469 = vmatprep.subr.mxu0 0.0
    %470 = vmatpush2.msra.mxu0 0.0
    %471 = vmatprep.subr.mxu0 0.0
    %472 = vmatpush2.msra.mxu0 0.0
    %473 = vmatprep.subr.mxu0 0.0
    %474 = vmatpush2.msra.mxu0 0.0
    %475 = vmatprep.subr.mxu0 0.0
    %476 = vmatpush2.msra.mxu0 0.0
    %477 = vmatprep.subr.mxu0 0.0
    %478 = vmatpush2.msra.mxu0 0.0
    %479 = vmatprep.subr.mxu0 0.0
    %480 = vmatpush2.msra.mxu0 0.0
    %481 = vmatprep.subr.mxu0 0.0
    %482 = vmatpush2.msra.mxu0 0.0
    %483 = vmatprep.subr.mxu0 0.0
    %484 = vmatpush2.msra.mxu0 0.0
    %485 = vmatprep.subr.mxu0 0.0
    %486 = vmatpush2.msra.mxu0 0.0
    %487 = vmatprep.subr.mxu0 0.0
    %488 = vmatpush2.msra.mxu0 0.0
    %489 = vmatprep.subr.mxu0 0.0
    %490 = vmatpush2.msra.mxu0 0.0
    %491 = vmatprep.subr.mxu0 0.0
    %492 = vmatpush2.msra.mxu0 0.0
    %493 = vmatprep.subr.mxu0 0.0
    %494 = vmatpush2.msra.mxu0 0.0
    %495 = vmatprep.subr.mxu0 0.0
    %496 = vmatpush2.msra.mxu0 0.0
    %497 = vmatprep.subr.mxu0 0.0
    %498 = vmatpush2.msra.mxu0 0.0
    %499 = vmatprep.subr.mxu0 0.0
    %500 = vmatpush2.msra.mxu0 0.0
    %501 = vmatprep.mubr.f32.mxu0 0.0
    %502 = vmatmul.mubr.f32.gmra.mxu0 %v415
    %v503 = vpop.f32.mrf.mxu0
    %v504 = vadd.f32 %v436, %v503
    %v505 = vpop.f32.mrf.mxu0
    %506 = vdwg.mxu0
    %v507 = vadd.f32 %v324, %v504
    %v508 = vld [vmem:[#allocation4 + $0x148] sm:$0x1]
    %v509 = vld [vmem:[#allocation4 + $0x150] sm:$0x1]
    %v510 = vsel %vm224, %v507, 0.0
    %511 = vadd.xlane.f32.xlu0 %v510
    %v512 = vpop.xlane.xlu0 %511
    %v513 = vmul.f32 %v512, %v304
    %v514 = vsub.f32 %v507, %v513
    %v515 = vmul.f32 %v514, %v514
    %v516 = vsel %vm224, %v515, 0.0
    %517 = vadd.xlane.f32.xlu0 %v516
    %v518 = vpop.xlane.xlu0 %517
    %v519 = vmul.f32 %v518, %v304
    %v520 = vadd.f32 %v519, 1e-05
    %v521 = vrsqrt.pop %v520
    %v522 = vmul.f32 %v514, %v521
    %v523 = vlaneseq
    %v524 = vshrl.u32 %v523, 7
    %v525 = vsub.s32 0, %v524
    %v526 = vrot.slane %v508, %v525
    %v527 = vmul.f32 %v522, %v526
    %v528 = vlaneseq
    %v529 = vshrl.u32 %v528, 7
    %v530 = vsub.s32 0, %v529
    %v531 = vrot.slane %v509, %v530
    %v532 = vadd.f32 %v527, %v531
    %v533 = vld [vmem:[#allocation4 + $0x158] sm:$0xff]
    %v534 = vld [vmem:[#allocation4 + $0x160] sm:$0xff]
    %v535 = vld [vmem:[#allocation4 + $0x168] sm:$0xff]
    %v536 = vld [vmem:[#allocation4 + $0x170] sm:$0xff]
    %v537 = vld [vmem:[#allocation4 + $0x178] sm:$0x1]
    %v538 = vlaneseq
    %v539 = vshrl.u32 %v538, 7
    %v540 = vsub.s32 0, %v539
    %v541 = vrot.slane %v537, %v540
    %v543 = vsel %vm224, %v532, 0
    %545 = vmatprep.subr.mxu0 0.0
    %546 = vmatpush1.msra.mxu0 0.0
    %547 = vmatprep.subr.mxu0 0.0
    %548 = vmatpush1.msra.mxu0 0.0
    %549 = vmatprep.subr.mxu0 0.0
    %550 = vmatpush1.msra.mxu0 0.0
    %551 = vmatprep.subr.mxu0 0.0
    %552 = vmatpush1.msra.mxu0 0.0
    %553 = vmatprep.subr.mxu0 0.0
    %554 = vmatpush1.msra.mxu0 0.0
    %555 = vmatprep.subr.mxu0 0.0
    %556 = vmatpush1.msra.mxu0 0.0
    %557 = vmatprep.subr.mxu0 0.0
    %558 = vmatpush1.msra.mxu0 0.0
    %559 = vmatprep.subr.mxu0 0.0
    %560 = vmatpush1.msra.mxu0 0.0
    %561 = vmatprep.subr.mxu0 0.0
    %562 = vmatpush1.msra.mxu0 0.0
    %563 = vmatprep.subr.mxu0 0.0
    %564 = vmatpush1.msra.mxu0 0.0
    %565 = vmatprep.subr.mxu0 0.0
    %566 = vmatpush1.msra.mxu0 0.0
    %567 = vmatprep.subr.mxu0 0.0
    %568 = vmatpush1.msra.mxu0 0.0
    %569 = vmatprep.subr.mxu0 0.0
    %570 = vmatpush1.msra.mxu0 %v536
    %571 = vmatprep.subr.mxu0 0.0
    %572 = vmatpush1.msra.mxu0 %v535
    %573 = vmatprep.subr.mxu0 0.0
    %574 = vmatpush1.msra.mxu0 %v534
    %575 = vmatprep.subr.mxu0 0.0
    %576 = vmatpush1.msra.mxu0 %v533
    %577 = vmatprep.subr.mxu0 0.0
    %578 = vmatpush2.msra.mxu0 0.0
    %579 = vmatprep.subr.mxu0 0.0
    %580 = vmatpush2.msra.mxu0 0.0
    %581 = vmatprep.subr.mxu0 0.0
    %582 = vmatpush2.msra.mxu0 0.0
    %583 = vmatprep.subr.mxu0 0.0
    %584 = vmatpush2.msra.mxu0 0.0
    %585 = vmatprep.subr.mxu0 0.0
    %586 = vmatpush2.msra.mxu0 0.0
    %587 = vmatprep.subr.mxu0 0.0
    %588 = vmatpush2.msra.mxu0 0.0
    %589 = vmatprep.subr.mxu0 0.0
    %590 = vmatpush2.msra.mxu0 0.0
    %591 = vmatprep.subr.mxu0 0.0
    %592 = vmatpush2.msra.mxu0 0.0
    %593 = vmatprep.subr.mxu0 0.0
    %594 = vmatpush2.msra.mxu0 0.0
    %595 = vmatprep.subr.mxu0 0.0
    %596 = vmatpush2.msra.mxu0 0.0
    %597 = vmatprep.subr.mxu0 0.0
    %598 = vmatpush2.msra.mxu0 0.0
    %599 = vmatprep.subr.mxu0 0.0
    %600 = vmatpush2.msra.mxu0 0.0
    %601 = vmatprep.subr.mxu0 0.0
    %602 = vmatpush2.msra.mxu0 0.0
    %603 = vmatprep.subr.mxu0 0.0
    %604 = vmatpush2.msra.mxu0 0.0
    %605 = vmatprep.subr.mxu0 0.0
    %606 = vmatpush2.msra.mxu0 0.0
    %607 = vmatprep.subr.mxu0 0.0
    %608 = vmatpush2.msra.mxu0 0.0
    %609 = vmatprep.mubr.f32.mxu0 0.0
    %610 = vmatmul.mubr.f32.gmra.mxu0 %v543
    %v611 = vpop.f32.mrf.mxu0
    %v612 = vadd.f32 %v541, %v611
    %v613 = vpop.f32.mrf.mxu0
    %614 = vdwg.mxu0
    %v615 = vxor.u32 %v612, 2147483648
    %v616 = vmul.f32 %v615, 1.442695
    %v617 = vpow.pop %v616
    %v618 = vadd.f32 %v617, 1.0
    %v619 = vrcp.pop %v618
    %v620 = vmul.f32 1.0, %v619
    %v621 = vmul.f32 %v612, %v620
    %v622 = vld [vmem:[#allocation4 + $0x180] sm:$0xff]
    %v623 = vld [vmem:[#allocation4 + $0x188] sm:$0xff]
    %v624 = vld [vmem:[#allocation4 + $0x190] sm:$0xff]
    %v625 = vld [vmem:[#allocation4 + $0x198] sm:$0xff]
    %v626 = vld [vmem:[#allocation4 + $0x1a0] sm:$0xff]
    %v627 = vld [vmem:[#allocation4 + $0x1a8] sm:$0xff]
    %v628 = vld [vmem:[#allocation4 + $0x1b0] sm:$0xff]
    %v629 = vld [vmem:[#allocation4 + $0x1b8] sm:$0xff]
    %v630 = vld [vmem:[#allocation4 + $0x1c0] sm:$0x1]
    %v631 = vlaneseq
    %v632 = vshrl.u32 %v631, 7
    %v633 = vsub.s32 0, %v632
    %v634 = vrot.slane %v630, %v633
    %v636 = vsel %vm141, %v621, 0
    %638 = vmatprep.subr.mxu0 0.0
    %639 = vmatpush1.msra.mxu0 0.0
    %640 = vmatprep.subr.mxu0 0.0
    %641 = vmatpush1.msra.mxu0 0.0
    %642 = vmatprep.subr.mxu0 0.0
    %643 = vmatpush1.msra.mxu0 0.0
    %644 = vmatprep.subr.mxu0 0.0
    %645 = vmatpush1.msra.mxu0 0.0
    %646 = vmatprep.subr.mxu0 0.0
    %647 = vmatpush1.msra.mxu0 0.0
    %648 = vmatprep.subr.mxu0 0.0
    %649 = vmatpush1.msra.mxu0 0.0
    %650 = vmatprep.subr.mxu0 0.0
    %651 = vmatpush1.msra.mxu0 0.0
    %652 = vmatprep.subr.mxu0 0.0
    %653 = vmatpush1.msra.mxu0 0.0
    %654 = vmatprep.subr.mxu0 0.0
    %655 = vmatpush1.msra.mxu0 %v629
    %656 = vmatprep.subr.mxu0 0.0
    %657 = vmatpush1.msra.mxu0 %v628
    %658 = vmatprep.subr.mxu0 0.0
    %659 = vmatpush1.msra.mxu0 %v627
    %660 = vmatprep.subr.mxu0 0.0
    %661 = vmatpush1.msra.mxu0 %v626
    %662 = vmatprep.subr.mxu0 0.0
    %663 = vmatpush1.msra.mxu0 %v625
    %664 = vmatprep.subr.mxu0 0.0
    %665 = vmatpush1.msra.mxu0 %v624
    %666 = vmatprep.subr.mxu0 0.0
    %667 = vmatpush1.msra.mxu0 %v623
    %668 = vmatprep.subr.mxu0 0.0
    %669 = vmatpush1.msra.mxu0 %v622
    %670 = vmatprep.subr.mxu0 0.0
    %671 = vmatpush2.msra.mxu0 0.0
    %672 = vmatprep.subr.mxu0 0.0
    %673 = vmatpush2.msra.mxu0 0.0
    %674 = vmatprep.subr.mxu0 0.0
    %675 = vmatpush2.msra.mxu0 0.0
    %676 = vmatprep.subr.mxu0 0.0
    %677 = vmatpush2.msra.mxu0 0.0
    %678 = vmatprep.subr.mxu0 0.0
    %679 = vmatpush2.msra.mxu0 0.0
    %680 = vmatprep.subr.mxu0 0.0
    %681 = vmatpush2.msra.mxu0 0.0
    %682 = vmatprep.subr.mxu0 0.0
    %683 = vmatpush2.msra.mxu0 0.0
    %684 = vmatprep.subr.mxu0 0.0
    %685 = vmatpush2.msra.mxu0 0.0
    %686 = vmatprep.subr.mxu0 0.0
    %687 = vmatpush2.msra.mxu0 0.0
    %688 = vmatprep.subr.mxu0 0.0
    %689 = vmatpush2.msra.mxu0 0.0
    %690 = vmatprep.subr.mxu0 0.0
    %691 = vmatpush2.msra.mxu0 0.0
    %692 = vmatprep.subr.mxu0 0.0
    %693 = vmatpush2.msra.mxu0 0.0
    %694 = vmatprep.subr.mxu0 0.0
    %695 = vmatpush2.msra.mxu0 0.0
    %696 = vmatprep.subr.mxu0 0.0
    %697 = vmatpush2.msra.mxu0 0.0
    %698 = vmatprep.subr.mxu0 0.0
    %699 = vmatpush2.msra.mxu0 0.0
    %700 = vmatprep.subr.mxu0 0.0
    %701 = vmatpush2.msra.mxu0 0.0
    %702 = vmatprep.mubr.f32.mxu0 0.0
    %703 = vmatmul.mubr.f32.gmra.mxu0 %v636
    %v704 = vpop.f32.mrf.mxu0
    %v705 = vadd.f32 %v634, %v704
    %v706 = vpop.f32.mrf.mxu0
    %707 = vdwg.mxu0
    %v708 = vadd.f32 %v705, %v532
    %v709 = vld [vmem:[#allocation4 + $0x1c8] sm:$0xff]
    %v710 = vld [vmem:[#allocation4 + $0x1d0] sm:$0xff]
    %v711 = vld [vmem:[#allocation4 + $0x1d8] sm:$0xff]
    %v712 = vld [vmem:[#allocation4 + $0x1e0] sm:$0xff]
    %v713 = vld [vmem:[#allocation4 + $0x1e8] sm:$0x1]
    %v714 = vlaneseq
    %v715 = vshrl.u32 %v714, 7
    %v716 = vsub.s32 0, %v715
    %v717 = vrot.slane %v713, %v716
    %v719 = vsel %vm224, %v708, 0
    %721 = vmatprep.subr.mxu0 0.0
    %722 = vmatpush1.msra.mxu0 0.0
    %723 = vmatprep.subr.mxu0 0.0
    %724 = vmatpush1.msra.mxu0 0.0
    %725 = vmatprep.subr.mxu0 0.0
    %726 = vmatpush1.msra.mxu0 0.0
    %727 = vmatprep.subr.mxu0 0.0
    %728 = vmatpush1.msra.mxu0 0.0
    %729 = vmatprep.subr.mxu0 0.0
    %730 = vmatpush1.msra.mxu0 0.0
    %731 = vmatprep.subr.mxu0 0.0
    %732 = vmatpush1.msra.mxu0 0.0
    %733 = vmatprep.subr.mxu0 0.0
    %734 = vmatpush1.msra.mxu0 0.0
    %735 = vmatprep.subr.mxu0 0.0
    %736 = vmatpush1.msra.mxu0 0.0
    %737 = vmatprep.subr.mxu0 0.0
    %738 = vmatpush1.msra.mxu0 0.0
    %739 = vmatprep.subr.mxu0 0.0
    %740 = vmatpush1.msra.mxu0 0.0
    %741 = vmatprep.subr.mxu0 0.0
    %742 = vmatpush1.msra.mxu0 0.0
    %743 = vmatprep.subr.mxu0 0.0
    %744 = vmatpush1.msra.mxu0 0.0
    %745 = vmatprep.subr.mxu0 0.0
    %746 = vmatpush1.msra.mxu0 %v712
    %747 = vmatprep.subr.mxu0 0.0
    %748 = vmatpush1.msra.mxu0 %v711
    %749 = vmatprep.subr.mxu0 0.0
    %750 = vmatpush1.msra.mxu0 %v710
    %751 = vmatprep.subr.mxu0 0.0
    %752 = vmatpush1.msra.mxu0 %v709
    %753 = vmatprep.subr.mxu0 0.0
    %754 = vmatpush2.msra.mxu0 0.0
    %755 = vmatprep.subr.mxu0 0.0
    %756 = vmatpush2.msra.mxu0 0.0
    %757 = vmatprep.subr.mxu0 0.0
    %758 = vmatpush2.msra.mxu0 0.0
    %759 = vmatprep.subr.mxu0 0.0
    %760 = vmatpush2.msra.mxu0 0.0
    %761 = vmatprep.subr.mxu0 0.0
    %762 = vmatpush2.msra.mxu0 0.0
    %763 = vmatprep.subr.mxu0 0.0
    %764 = vmatpush2.msra.mxu0 0.0
    %765 = vmatprep.subr.mxu0 0.0
    %766 = vmatpush2.msra.mxu0 0.0
    %767 = vmatprep.subr.mxu0 0.0
    %768 = vmatpush2.msra.mxu0 0.0
    %769 = vmatprep.subr.mxu0 0.0
    %770 = vmatpush2.msra.mxu0 0.0
    %771 = vmatprep.subr.mxu0 0.0
    %772 = vmatpush2.msra.mxu0 0.0
    %773 = vmatprep.subr.mxu0 0.0
    %774 = vmatpush2.msra.mxu0 0.0
    %775 = vmatprep.subr.mxu0 0.0
    %776 = vmatpush2.msra.mxu0 0.0
    %777 = vmatprep.subr.mxu0 0.0
    %778 = vmatpush2.msra.mxu0 0.0
    %779 = vmatprep.subr.mxu0 0.0
    %780 = vmatpush2.msra.mxu0 0.0
    %781 = vmatprep.subr.mxu0 0.0
    %782 = vmatpush2.msra.mxu0 0.0
    %783 = vmatprep.subr.mxu0 0.0
    %784 = vmatpush2.msra.mxu0 0.0
    %785 = vmatprep.mubr.f32.mxu0 0.0
    %786 = vmatmul.mubr.f32.gmra.mxu0 %v719
    %v787 = vpop.f32.mrf.mxu0
    %v788 = vadd.f32 %v717, %v787
    %v789 = vpop.f32.mrf.mxu0
    %790 = vdwg.mxu0
    %v791 = vadd.f32 %v708, %v788
    %v792 = vld [vmem:[#allocation4 + $0x1f0] sm:$0x1]
    %v793 = vld [vmem:[#allocation4 + $0x1f8] sm:$0x1]
    %v794 = vsel %vm224, %v791, 0.0
    %795 = vadd.xlane.f32.xlu0 %v794
    %v796 = vpop.xlane.xlu0 %795
    %v797 = vmul.f32 %v796, %v304
    %v798 = vsub.f32 %v791, %v797
    %v799 = vmul.f32 %v798, %v798
    %v800 = vsel %vm224, %v799, 0.0
    %801 = vadd.xlane.f32.xlu0 %v800
    %v802 = vpop.xlane.xlu0 %801
    %v803 = vmul.f32 %v802, %v304
    %v804 = vadd.f32 %v803, 1e-05
    %v805 = vrsqrt.pop %v804
    %v806 = vmul.f32 %v798, %v805
    %v807 = vlaneseq
    %v808 = vshrl.u32 %v807, 7
    %v809 = vsub.s32 0, %v808
    %v810 = vrot.slane %v792, %v809
    %v811 = vmul.f32 %v806, %v810
    %v812 = vlaneseq
    %v813 = vshrl.u32 %v812, 7
    %v814 = vsub.s32 0, %v813
    %v815 = vrot.slane %v793, %v814
    %v816 = vadd.f32 %v811, %v815
    %v817 = vld [vmem:[#allocation4 + $0x200] sm:$0xff]
    %v818 = vld [vmem:[#allocation4 + $0x208] sm:$0xff]
    %v819 = vld [vmem:[#allocation4 + $0x210] sm:$0xff]
    %v820 = vld [vmem:[#allocation4 + $0x218] sm:$0xff]
    %v821 = vld [vmem:[#allocation4 + $0x220] sm:$0x1]
    %v822 = vlaneseq
    %v823 = vshrl.u32 %v822, 7
    %v824 = vsub.s32 0, %v823
    %v825 = vrot.slane %v821, %v824
    %v827 = vsel %vm224, %v816, 0
    %829 = vmatprep.subr.mxu0 0.0
    %830 = vmatpush1.msra.mxu0 0.0
    %831 = vmatprep.subr.mxu0 0.0
    %832 = vmatpush1.msra.mxu0 0.0
    %833 = vmatprep.subr.mxu0 0.0
    %834 = vmatpush1.msra.mxu0 0.0
    %835 = vmatprep.subr.mxu0 0.0
    %836 = vmatpush1.msra.mxu0 0.0
    %837 = vmatprep.subr.mxu0 0.0
    %838 = vmatpush1.msra.mxu0 0.0
    %839 = vmatprep.subr.mxu0 0.0
    %840 = vmatpush1.msra.mxu0 0.0
    %841 = vmatprep.subr.mxu0 0.0
    %842 = vmatpush1.msra.mxu0 0.0
    %843 = vmatprep.subr.mxu0 0.0
    %844 = vmatpush1.msra.mxu0 0.0
    %845 = vmatprep.subr.mxu0 0.0
    %846 = vmatpush1.msra.mxu0 0.0
    %847 = vmatprep.subr.mxu0 0.0
    %848 = vmatpush1.msra.mxu0 0.0
    %849 = vmatprep.subr.mxu0 0.0
    %850 = vmatpush1.msra.mxu0 0.0
    %851 = vmatprep.subr.mxu0 0.0
    %852 = vmatpush1.msra.mxu0 0.0
    %853 = vmatprep.subr.mxu0 0.0
    %854 = vmatpush1.msra.mxu0 %v820
    %855 = vmatprep.subr.mxu0 0.0
    %856 = vmatpush1.msra.mxu0 %v819
    %857 = vmatprep.subr.mxu0 0.0
    %858 = vmatpush1.msra.mxu0 %v818
    %859 = vmatprep.subr.mxu0 0.0
    %860 = vmatpush1.msra.mxu0 %v817
    %861 = vmatprep.subr.mxu0 0.0
    %862 = vmatpush2.msra.mxu0 0.0
    %863 = vmatprep.subr.mxu0 0.0
    %864 = vmatpush2.msra.mxu0 0.0
    %865 = vmatprep.subr.mxu0 0.0
    %866 = vmatpush2.msra.mxu0 0.0
    %867 = vmatprep.subr.mxu0 0.0
    %868 = vmatpush2.msra.mxu0 0.0
    %869 = vmatprep.subr.mxu0 0.0
    %870 = vmatpush2.msra.mxu0 0.0
    %871 = vmatprep.subr.mxu0 0.0
    %872 = vmatpush2.msra.mxu0 0.0
    %873 = vmatprep.subr.mxu0 0.0
    %874 = vmatpush2.msra.mxu0 0.0
    %875 = vmatprep.subr.mxu0 0.0
    %876 = vmatpush2.msra.mxu0 0.0
    %877 = vmatprep.subr.mxu0 0.0
    %878 = vmatpush2.msra.mxu0 0.0
    %879 = vmatprep.subr.mxu0 0.0
    %880 = vmatpush2.msra.mxu0 0.0
    %881 = vmatprep.subr.mxu0 0.0
    %882 = vmatpush2.msra.mxu0 0.0
    %883 = vmatprep.subr.mxu0 0.0
    %884 = vmatpush2.msra.mxu0 0.0
    %885 = vmatprep.subr.mxu0 0.0
    %886 = vmatpush2.msra.mxu0 0.0
    %887 = vmatprep.subr.mxu0 0.0
    %888 = vmatpush2.msra.mxu0 0.0
    %889 = vmatprep.subr.mxu0 0.0
    %890 = vmatpush2.msra.mxu0 0.0
    %891 = vmatprep.subr.mxu0 0.0
    %892 = vmatpush2.msra.mxu0 0.0
    %893 = vmatprep.mubr.f32.mxu0 0.0
    %894 = vmatmul.mubr.f32.gmra.mxu0 %v827
    %v895 = vpop.f32.mrf.mxu0
    %v896 = vadd.f32 %v825, %v895
    %v897 = vpop.f32.mrf.mxu0
    %898 = vdwg.mxu0
    %v899 = vmul.f32 %v896, %v896
    %v900 = vmul.f32 %v896, %v899
    %v901 = vmul.f32 %v900, 0.044715
    %v902 = vadd.f32 %v896, %v901
    %v903 = vmul.f32 %v902, 0.7978846
    %v904 = vtanh.pop %v903
    %v905 = vadd.f32 %v904, 1.0
    %v906 = vmul.f32 %v905, 0.5
    %v907 = vmul.f32 %v896, %v906
    %v908 = vld [vmem:[#allocation4 + $0x228] sm:$0xff]
    %v909 = vld [vmem:[#allocation4 + $0x230] sm:$0xff]
    %v910 = vld [vmem:[#allocation4 + $0x238] sm:$0xff]
    %v911 = vld [vmem:[#allocation4 + $0x240] sm:$0xff]
    %v912 = vld [vmem:[#allocation4 + $0x248] sm:$0xff]
    %v913 = vld [vmem:[#allocation4 + $0x250] sm:$0xff]
    %v914 = vld [vmem:[#allocation4 + $0x258] sm:$0xff]
    %v915 = vld [vmem:[#allocation4 + $0x260] sm:$0xff]
    %v916 = vld [vmem:[#allocation4 + $0x268] sm:$0xff]
    %v917 = vld [vmem:[#allocation4 + $0x270] sm:$0xff]
    %v918 = vld [vmem:[#allocation4 + $0x278] sm:$0xff]
    %v919 = vld [vmem:[#allocation4 + $0x280] sm:$0xff]
    %v920 = vld [vmem:[#allocation4 + $0x288] sm:$0xff]
    %v921 = vld [vmem:[#allocation4 + $0x290] sm:$0xff]
    %v922 = vld [vmem:[#allocation4 + $0x298] sm:$0xff]
    %v923 = vld [vmem:[#allocation4 + $0x2a0] sm:$0xff]
    %v924 = vld [vmem:[#allocation4 + $0x2a8] sm:$0x1]
    %v925 = vlaneseq
    %v926 = vshrl.u32 %v925, 7
    %v927 = vsub.s32 0, %v926
    %v928 = vrot.slane %v924, %v927
    %929 = vmatprep.subr.mxu0 0.0
    %930 = vmatpush1.msra.mxu0 %v923
    %931 = vmatprep.subr.mxu0 0.0
    %932 = vmatpush1.msra.mxu0 %v922
    %933 = vmatprep.subr.mxu0 0.0
    %934 = vmatpush1.msra.mxu0 %v921
    %935 = vmatprep.subr.mxu0 0.0
    %936 = vmatpush1.msra.mxu0 %v920
    %937 = vmatprep.subr.mxu0 0.0
    %938 = vmatpush1.msra.mxu0 %v919
    %939 = vmatprep.subr.mxu0 0.0
    %940 = vmatpush1.msra.mxu0 %v918
    %941 = vmatprep.subr.mxu0 0.0
    %942 = vmatpush1.msra.mxu0 %v917
    %943 = vmatprep.subr.mxu0 0.0
    %944 = vmatpush1.msra.mxu0 %v916
    %945 = vmatprep.subr.mxu0 0.0
    %946 = vmatpush1.msra.mxu0 %v915
    %947 = vmatprep.subr.mxu0 0.0
    %948 = vmatpush1.msra.mxu0 %v914
    %949 = vmatprep.subr.mxu0 0.0
    %950 = vmatpush1.msra.mxu0 %v913
    %951 = vmatprep.subr.mxu0 0.0
    %952 = vmatpush1.msra.mxu0 %v912
    %953 = vmatprep.subr.mxu0 0.0
    %954 = vmatpush1.msra.mxu0 %v911
    %955 = vmatprep.subr.mxu0 0.0
    %956 = vmatpush1.msra.mxu0 %v910
    %957 = vmatprep.subr.mxu0 0.0
    %958 = vmatpush1.msra.mxu0 %v909
    %959 = vmatprep.subr.mxu0 0.0
    %960 = vmatpush1.msra.mxu0 %v908
    %961 = vmatprep.subr.mxu0 0.0
    %962 = vmatpush2.msra.mxu0 0.0
    %963 = vmatprep.subr.mxu0 0.0
    %964 = vmatpush2.msra.mxu0 0.0
    %965 = vmatprep.subr.mxu0 0.0
    %966 = vmatpush2.msra.mxu0 0.0
    %967 = vmatprep.subr.mxu0 0.0
    %968 = vmatpush2.msra.mxu0 0.0
    %969 = vmatprep.subr.mxu0 0.0
    %970 = vmatpush2.msra.mxu0 0.0
    %971 = vmatprep.subr.mxu0 0.0
    %972 = vmatpush2.msra.mxu0 0.0
    %973 = vmatprep.subr.mxu0 0.0
    %974 = vmatpush2.msra.mxu0 0.0
    %975 = vmatprep.subr.mxu0 0.0
    %976 = vmatpush2.msra.mxu0 0.0
    %977 = vmatprep.subr.mxu0 0.0
    %978 = vmatpush2.msra.mxu0 0.0
    %979 = vmatprep.subr.mxu0 0.0
    %980 = vmatpush2.msra.mxu0 0.0
    %981 = vmatprep.subr.mxu0 0.0
    %982 = vmatpush2.msra.mxu0 0.0
    %983 = vmatprep.subr.mxu0 0.0
    %984 = vmatpush2.msra.mxu0 0.0
    %985 = vmatprep.subr.mxu0 0.0
    %986 = vmatpush2.msra.mxu0 0.0
    %987 = vmatprep.subr.mxu0 0.0
    %988 = vmatpush2.msra.mxu0 0.0
    %989 = vmatprep.subr.mxu0 0.0
    %990 = vmatpush2.msra.mxu0 0.0
    %991 = vmatprep.subr.mxu0 0.0
    %992 = vmatpush2.msra.mxu0 0.0
    %993 = vmatprep.mubr.f32.mxu0 0.0
    %994 = vmatmul.mubr.f32.gmra.mxu0 %v907
    %v995 = vpop.f32.mrf.mxu0
    %v996 = vadd.f32 %v928, %v995
    %v997 = vpop.f32.mrf.mxu0
    %998 = vdwg.mxu0
    %v999 = vadd.f32 %v816, %v996
    %v1000 = vld [vmem:[#allocation4 + $0x2b0] sm:$0x1]
    %v1001 = vld [vmem:[#allocation4 + $0x2b8] sm:$0x1]
    %v1002 = vsel %vm224, %v999, 0.0
    %1003 = vadd.xlane.f32.xlu0 %v1002
    %v1004 = vpop.xlane.xlu0 %1003
    %v1005 = vmul.f32 %v1004, %v304
    %v1006 = vsub.f32 %v999, %v1005
    %v1007 = vmul.f32 %v1006, %v1006
    %v1008 = vsel %vm224, %v1007, 0.0
    %1009 = vadd.xlane.f32.xlu0 %v1008
    %v1010 = vpop.xlane.xlu0 %1009
    %v1011 = vmul.f32 %v1010, %v304
    %v1012 = vadd.f32 %v1011, 1e-05
    %v1013 = vrsqrt.pop %v1012
    %v1014 = vmul.f32 %v1006, %v1013
    %v1015 = vlaneseq
    %v1016 = vshrl.u32 %v1015, 7
    %v1017 = vsub.s32 0, %v1016
    %v1018 = vrot.slane %v1000, %v1017
    %v1019 = vmul.f32 %v1014, %v1018
    %v1020 = vlaneseq
    %v1021 = vshrl.u32 %v1020, 7
    %v1022 = vsub.s32 0, %v1021
    %v1023 = vrot.slane %v1001, %v1022
    %v1024 = vadd.f32 %v1019, %v1023
    %v1025 = vld [vmem:[#allocation4 + $0x2c0] sm:$0xff]
    %v1026 = vld [vmem:[#allocation4 + $0x2c8] sm:$0xff]
    %v1027 = vld [vmem:[#allocation4 + $0x2d0] sm:$0xff]
    %v1028 = vld [vmem:[#allocation4 + $0x2d8] sm:$0xff]
    %v1029 = vld [vmem:[#allocation4 + $0x2e0] sm:$0x1]
    %v1030 = vlaneseq
    %v1031 = vshrl.u32 %v1030, 7
    %v1032 = vsub.s32 0, %v1031
    %v1033 = vrot.slane %v1029, %v1032
    %v1035 = vsel %vm224, %v1024, 0
    %1037 = vmatprep.subr.mxu0 0.0
    %1038 = vmatpush1.msra.mxu0 0.0
    %1039 = vmatprep.subr.mxu0 0.0
    %1040 = vmatpush1.msra.mxu0 0.0
    %1041 = vmatprep.subr.mxu0 0.0
    %1042 = vmatpush1.msra.mxu0 0.0
    %1043 = vmatprep.subr.mxu0 0.0
    %1044 = vmatpush1.msra.mxu0 0.0
    %1045 = vmatprep.subr.mxu0 0.0
    %1046 = vmatpush1.msra.mxu0 0.0
    %1047 = vmatprep.subr.mxu0 0.0
    %1048 = vmatpush1.msra.mxu0 0.0
    %1049 = vmatprep.subr.mxu0 0.0
    %1050 = vmatpush1.msra.mxu0 0.0
    %1051 = vmatprep.subr.mxu0 0.0
    %1052 = vmatpush1.msra.mxu0 0.0
    %1053 = vmatprep.subr.mxu0 0.0
    %1054 = vmatpush1.msra.mxu0 0.0
    %1055 = vmatprep.subr.mxu0 0.0
    %1056 = vmatpush1.msra.mxu0 0.0
    %1057 = vmatprep.subr.mxu0 0.0
    %1058 = vmatpush1.msra.mxu0 0.0
    %1059 = vmatprep.subr.mxu0 0.0
    %1060 = vmatpush1.msra.mxu0 0.0
    %1061 = vmatprep.subr.mxu0 0.0
    %1062 = vmatpush1.msra.mxu0 %v1028
    %1063 = vmatprep.subr.mxu0 0.0
    %1064 = vmatpush1.msra.mxu0 %v1027
    %1065 = vmatprep.subr.mxu0 0.0
    %1066 = vmatpush1.msra.mxu0 %v1026
    %1067 = vmatprep.subr.mxu0 0.0
    %1068 = vmatpush1.msra.mxu0 %v1025
    %1069 = vmatprep.subr.mxu0 0.0
    %1070 = vmatpush2.msra.mxu0 0.0
    %1071 = vmatprep.subr.mxu0 0.0
    %1072 = vmatpush2.msra.mxu0 0.0
    %1073 = vmatprep.subr.mxu0 0.0
    %1074 = vmatpush2.msra.mxu0 0.0
    %1075 = vmatprep.subr.mxu0 0.0
    %1076 = vmatpush2.msra.mxu0 0.0
    %1077 = vmatprep.subr.mxu0 0.0
    %1078 = vmatpush2.msra.mxu0 0.0
    %1079 = vmatprep.subr.mxu0 0.0
    %1080 = vmatpush2.msra.mxu0 0.0
    %1081 = vmatprep.subr.mxu0 0.0
    %1082 = vmatpush2.msra.mxu0 0.0
    %1083 = vmatprep.subr.mxu0 0.0
    %1084 = vmatpush2.msra.mxu0 0.0
    %1085 = vmatprep.subr.mxu0 0.0
    %1086 = vmatpush2.msra.mxu0 0.0
    %1087 = vmatprep.subr.mxu0 0.0
    %1088 = vmatpush2.msra.mxu0 0.0
    %1089 = vmatprep.subr.mxu0 0.0
    %1090 = vmatpush2.msra.mxu0 0.0
    %1091 = vmatprep.subr.mxu0 0.0
    %1092 = vmatpush2.msra.mxu0 0.0
    %1093 = vmatprep.subr.mxu0 0.0
    %1094 = vmatpush2.msra.mxu0 0.0
    %1095 = vmatprep.subr.mxu0 0.0
    %1096 = vmatpush2.msra.mxu0 0.0
    %1097 = vmatprep.subr.mxu0 0.0
    %1098 = vmatpush2.msra.mxu0 0.0
    %1099 = vmatprep.subr.mxu0 0.0
    %1100 = vmatpush2.msra.mxu0 0.0
    %1101 = vmatprep.mubr.f32.mxu0 0.0
    %1102 = vmatmul.mubr.f32.gmra.mxu0 %v1035
    %v1103 = vpop.f32.mrf.mxu0
    %v1104 = vadd.f32 %v1033, %v1103
    %v1105 = vpop.f32.mrf.mxu0
    %1106 = vdwg.mxu0
    %v1107 = vxor.u32 %v1104, 2147483648
    %v1108 = vmul.f32 %v1107, 1.442695
    %v1109 = vpow.pop %v1108
    %v1110 = vadd.f32 %v1109, 1.0
    %v1111 = vrcp.pop %v1110
    %v1112 = vmul.f32 1.0, %v1111
    %v1113 = vmul.f32 %v1104, %v1112
    %v1114 = vld [vmem:[#allocation4 + $0x2e8] sm:$0xff]
    %v1115 = vld [vmem:[#allocation4 + $0x2f0] sm:$0xff]
    %v1116 = vld [vmem:[#allocation4 + $0x2f8] sm:$0xff]
    %v1117 = vld [vmem:[#allocation4 + $0x300] sm:$0xff]
    %v1118 = vld [vmem:[#allocation4 + $0x308] sm:$0xff]
    %v1119 = vld [vmem:[#allocation4 + $0x310] sm:$0xff]
    %v1120 = vld [vmem:[#allocation4 + $0x318] sm:$0xff]
    %v1121 = vld [vmem:[#allocation4 + $0x320] sm:$0xff]
    %v1122 = vld [vmem:[#allocation4 + $0x328] sm:$0x1]
    %v1123 = vlaneseq
    %v1124 = vshrl.u32 %v1123, 7
    %v1125 = vsub.s32 0, %v1124
    %v1126 = vrot.slane %v1122, %v1125
    %v1128 = vsel %vm141, %v1113, 0
    %1130 = vmatprep.subr.mxu0 0.0
    %1131 = vmatpush1.msra.mxu0 0.0
    %1132 = vmatprep.subr.mxu0 0.0
    %1133 = vmatpush1.msra.mxu0 0.0
    %1134 = vmatprep.subr.mxu0 0.0
    %1135 = vmatpush1.msra.mxu0 0.0
    %1136 = vmatprep.subr.mxu0 0.0
    %1137 = vmatpush1.msra.mxu0 0.0
    %1138 = vmatprep.subr.mxu0 0.0
    %1139 = vmatpush1.msra.mxu0 0.0
    %1140 = vmatprep.subr.mxu0 0.0
    %1141 = vmatpush1.msra.mxu0 0.0
    %1142 = vmatprep.subr.mxu0 0.0
    %1143 = vmatpush1.msra.mxu0 0.0
    %1144 = vmatprep.subr.mxu0 0.0
    %1145 = vmatpush1.msra.mxu0 0.0
    %1146 = vmatprep.subr.mxu0 0.0
    %1147 = vmatpush1.msra.mxu0 %v1121
    %1148 = vmatprep.subr.mxu0 0.0
    %1149 = vmatpush1.msra.mxu0 %v1120
    %1150 = vmatprep.subr.mxu0 0.0
    %1151 = vmatpush1.msra.mxu0 %v1119
    %1152 = vmatprep.subr.mxu0 0.0
    %1153 = vmatpush1.msra.mxu0 %v1118
    %1154 = vmatprep.subr.mxu0 0.0
    %1155 = vmatpush1.msra.mxu0 %v1117
    %1156 = vmatprep.subr.mxu0 0.0
    %1157 = vmatpush1.msra.mxu0 %v1116
    %1158 = vmatprep.subr.mxu0 0.0
    %1159 = vmatpush1.msra.mxu0 %v1115
    %1160 = vmatprep.subr.mxu0 0.0
    %1161 = vmatpush1.msra.mxu0 %v1114
    %1162 = vmatprep.subr.mxu0 0.0
    %1163 = vmatpush2.msra.mxu0 0.0
    %1164 = vmatprep.subr.mxu0 0.0
    %1165 = vmatpush2.msra.mxu0 0.0
    %1166 = vmatprep.subr.mxu0 0.0
    %1167 = vmatpush2.msra.mxu0 0.0
    %1168 = vmatprep.subr.mxu0 0.0
    %1169 = vmatpush2.msra.mxu0 0.0
    %1170 = vmatprep.subr.mxu0 0.0
    %1171 = vmatpush2.msra.mxu0 0.0
    %1172 = vmatprep.subr.mxu0 0.0
    %1173 = vmatpush2.msra.mxu0 0.0
    %1174 = vmatprep.subr.mxu0 0.0
    %1175 = vmatpush2.msra.mxu0 0.0
    %1176 = vmatprep.subr.mxu0 0.0
    %1177 = vmatpush2.msra.mxu0 0.0
    %1178 = vmatprep.subr.mxu0 0.0
    %1179 = vmatpush2.msra.mxu0 0.0
    %1180 = vmatprep.subr.mxu0 0.0
    %1181 = vmatpush2.msra.mxu0 0.0
    %1182 = vmatprep.subr.mxu0 0.0
    %1183 = vmatpush2.msra.mxu0 0.0
    %1184 = vmatprep.subr.mxu0 0.0
    %1185 = vmatpush2.msra.mxu0 0.0
    %1186 = vmatprep.subr.mxu0 0.0
    %1187 = vmatpush2.msra.mxu0 0.0
    %1188 = vmatprep.subr.mxu0 0.0
    %1189 = vmatpush2.msra.mxu0 0.0
    %1190 = vmatprep.subr.mxu0 0.0
    %1191 = vmatpush2.msra.mxu0 0.0
    %1192 = vmatprep.subr.mxu0 0.0
    %1193 = vmatpush2.msra.mxu0 0.0
    %1194 = vmatprep.mubr.f32.mxu0 0.0
    %1195 = vmatmul.mubr.f32.gmra.mxu0 %v1128
    %v1196 = vpop.f32.mrf.mxu0
    %v1197 = vadd.f32 %v1126, %v1196
    %v1198 = vpop.f32.mrf.mxu0
    %1199 = vdwg.mxu0
    %v1200 = vadd.f32 %v1197, %v1024
    %v1201 = vld [vmem:[#allocation4 + $0x330] sm:$0xff]
    %v1202 = vld [vmem:[#allocation4 + $0x338] sm:$0xff]
    %v1203 = vld [vmem:[#allocation4 + $0x340] sm:$0xff]
    %v1204 = vld [vmem:[#allocation4 + $0x348] sm:$0xff]
    %v1205 = vld [vmem:[#allocation4 + $0x350] sm:$0x1]
    %v1206 = vlaneseq
    %v1207 = vshrl.u32 %v1206, 7
    %v1208 = vsub.s32 0, %v1207
    %v1209 = vrot.slane %v1205, %v1208
    %v1211 = vsel %vm224, %v1200, 0
    %1213 = vmatprep.subr.mxu0 0.0
    %1214 = vmatpush1.msra.mxu0 0.0
    %1215 = vmatprep.subr.mxu0 0.0
    %1216 = vmatpush1.msra.mxu0 0.0
    %1217 = vmatprep.subr.mxu0 0.0
    %1218 = vmatpush1.msra.mxu0 0.0
    %1219 = vmatprep.subr.mxu0 0.0
    %1220 = vmatpush1.msra.mxu0 0.0
    %1221 = vmatprep.subr.mxu0 0.0
    %1222 = vmatpush1.msra.mxu0 0.0
    %1223 = vmatprep.subr.mxu0 0.0
    %1224 = vmatpush1.msra.mxu0 0.0
    %1225 = vmatprep.subr.mxu0 0.0
    %1226 = vmatpush1.msra.mxu0 0.0
    %1227 = vmatprep.subr.mxu0 0.0
    %1228 = vmatpush1.msra.mxu0 0.0
    %1229 = vmatprep.subr.mxu0 0.0
    %1230 = vmatpush1.msra.mxu0 0.0
    %1231 = vmatprep.subr.mxu0 0.0
    %1232 = vmatpush1.msra.mxu0 0.0
    %1233 = vmatprep.subr.mxu0 0.0
    %1234 = vmatpush1.msra.mxu0 0.0
    %1235 = vmatprep.subr.mxu0 0.0
    %1236 = vmatpush1.msra.mxu0 0.0
    %1237 = vmatprep.subr.mxu0 0.0
    %1238 = vmatpush1.msra.mxu0 %v1204
    %1239 = vmatprep.subr.mxu0 0.0
    %1240 = vmatpush1.msra.mxu0 %v1203
    %1241 = vmatprep.subr.mxu0 0.0
    %1242 = vmatpush1.msra.mxu0 %v1202
    %1243 = vmatprep.subr.mxu0 0.0
    %1244 = vmatpush1.msra.mxu0 %v1201
    %1245 = vmatprep.subr.mxu0 0.0
    %1246 = vmatpush2.msra.mxu0 0.0
    %1247 = vmatprep.subr.mxu0 0.0
    %1248 = vmatpush2.msra.mxu0 0.0
    %1249 = vmatprep.subr.mxu0 0.0
    %1250 = vmatpush2.msra.mxu0 0.0
    %1251 = vmatprep.subr.mxu0 0.0
    %1252 = vmatpush2.msra.mxu0 0.0
    %1253 = vmatprep.subr.mxu0 0.0
    %1254 = vmatpush2.msra.mxu0 0.0
    %1255 = vmatprep.subr.mxu0 0.0
    %1256 = vmatpush2.msra.mxu0 0.0
    %1257 = vmatprep.subr.mxu0 0.0
    %1258 = vmatpush2.msra.mxu0 0.0
    %1259 = vmatprep.subr.mxu0 0.0
    %1260 = vmatpush2.msra.mxu0 0.0
    %1261 = vmatprep.subr.mxu0 0.0
    %1262 = vmatpush2.msra.mxu0 0.0
    %1263 = vmatprep.subr.mxu0 0.0
    %1264 = vmatpush2.msra.mxu0 0.0
    %1265 = vmatprep.subr.mxu0 0.0
    %1266 = vmatpush2.msra.mxu0 0.0
    %1267 = vmatprep.subr.mxu0 0.0
    %1268 = vmatpush2.msra.mxu0 0.0
    %1269 = vmatprep.subr.mxu0 0.0
    %1270 = vmatpush2.msra.mxu0 0.0
    %1271 = vmatprep.subr.mxu0 0.0
    %1272 = vmatpush2.msra.mxu0 0.0
    %1273 = vmatprep.subr.mxu0 0.0
    %1274 = vmatpush2.msra.mxu0 0.0
    %1275 = vmatprep.subr.mxu0 0.0
    %1276 = vmatpush2.msra.mxu0 0.0
    %1277 = vmatprep.mubr.f32.mxu0 0.0
    %1278 = vmatmul.mubr.f32.gmra.mxu0 %v1211
    %v1279 = vpop.f32.mrf.mxu0
    %v1280 = vadd.f32 %v1209, %v1279
    %v1281 = vpop.f32.mrf.mxu0
    %1282 = vdwg.mxu0
    %1283 = vst [vmem:[%s2] sm:$0xff] %v1280
    // Predicated region
    $region18: #{forward.1} parent=1 // pred_check
      _
    $region19: #{forward.1} parent=1 // pred_check_branch
      %1285 = sbr.rel (0) target = $region21
    $region20: #{forward.1} parent=1 // pred_region
      _
    $region21: #{forward.1} parent=1 // pred_fallthru
      _
    // Predicated region
    $region22: #{forward.1} parent=1 // pred_check
      _
    $region23: #{forward.1} parent=1 // pred_check_branch
      %1287 = sbr.rel (0) target = $region25
    $region24: #{forward.1} parent=1 // pred_region
      _
    $region25: #{forward.1} parent=1 // pred_fallthru
      _
    %1288 = vsyncpa [#allocation3], 1
    %1289 = vsyncpa [#allocation5], 1

</llo_original>
